<compile_context>
chip_gen: v6e
topology: v6e:2x2x1
jax: 0.10.0
libtpu: 0.0.40
codegen_flags: <defaults>
</compile_context>

<pallas_src>
import functools
from typing import NamedTuple

import jax
import jax.numpy as jnp
from jax.experimental import pallas as pl
from jax.experimental.pallas import tpu as pltpu

BN_EPS = 1e-5


class GenConfig(NamedTuple):
    channels_img: int
    out_len: int
    bn_lens: tuple  # (L1, L2, L3, L4)


# ----------------------------------------------------------------------------
# Pallas kernel factory: the entire generator forward fused into one
# VMEM-resident kernel (4x [convT+BN+ReLU], fused convT+bias+Linear, tanh).
# ----------------------------------------------------------------------------
def _make_gen_kernel(bn_counts, use_mask):
    """bn_counts: per-BN-layer normalization counts (= n_real * L_layer).
    use_mask:   whether padded batch rows exist and must be re-zeroed."""
    cnt1, cnt2, cnt3, cnt4 = (float(c) for c in bn_counts)

    def bn_relu(h, p, pt, gamma, beta, cnt, mask, sel0, sel1):
        # h: (Npad, C*L) f32.  Training-mode BatchNorm1d (biased var) + ReLU.
        # Per-channel reduce / broadcast use host-precomputed 0/1 pooling
        # matrices p (C*L, C) and pt (C, C*L) (stored bf16, upcast here) so
        # they run on the MXU; all statistics math stays f32.
        s = jnp.sum(h, axis=0, keepdims=True)             # (1, CL)
        ss = jnp.sum(h * h, axis=0, keepdims=True)        # (1, CL)
        stats = sel0 * s + sel1 * ss                      # (2, CL): row0=s, row1=ss
        pooled = jnp.dot(stats, p.astype(jnp.float32),
                         preferred_element_type=jnp.float32)        # (2, C)
        mean = pooled[0:1] / cnt
        var = jnp.maximum(pooled[1:2] / cnt - mean * mean, 0.0)     # clamp cancellation
        inv = jax.lax.rsqrt(var + BN_EPS)
        a = gamma * inv                                   # (1, C)
        b = beta - mean * a                               # (1, C)
        ab = sel0 * a + sel1 * b                          # (2, C): row0=a, row1=b
        ab_full = jnp.dot(ab, pt.astype(jnp.float32),
                          preferred_element_type=jnp.float32)       # (2, CL)
        out = jnp.maximum(h * ab_full[0:1] + ab_full[1:2], 0.0)
        if use_mask:
            # Re-zero padded batch rows so they never pollute the next layer's
            # batch statistics (the lowered convs carry no bias, so zero rows
            # stay zero through every matmul).
            out = out * mask
        return out

    def kernel(*refs):
        if use_mask:
            x_ref, mask_ref = refs[0], refs[1]
            rest = refs[2:]
            mask = mask_ref[...]                          # (Npad, 1) f32
        else:
            x_ref = refs[0]
            rest = refs[1:]
            mask = None

        (m1_ref, p1_ref, pt1_ref, g1_ref, b1_ref,
         m2_ref, p2_ref, pt2_ref, g2_ref, b2_ref,
         m3_ref, p3_ref, pt3_ref, g3_ref, b3_ref,
         m4_ref, p4_ref, pt4_ref, g4_ref, b4_ref,
         m5w_ref, bias5w_ref, out_ref) = rest

        # Row selectors used to stack two (1, X) rows into one (2, X) MXU
        # operand without a sublane concat (built once per call, 1 vreg).
        sel0 = (jax.lax.broadcasted_iota(jnp.int32, (2, 1), 0) == 0
                ).astype(jnp.float32)
        sel1 = 1.0 - sel0

        def dot_bf16(act, w_ref):
            # bf16 x bf16 MXU inputs, f32 accumulation.
            return jnp.dot(act.astype(jnp.bfloat16), w_ref[...],
                           preferred_element_type=jnp.float32)

        h = dot_bf16(x_ref[...], m1_ref)                  # (Npad, fg16*4)
        h = bn_relu(h, p1_ref[...], pt1_ref[...], g1_ref[...], b1_ref[...],
                    cnt1, mask, sel0, sel1)
        h = dot_bf16(h, m2_ref)                           # (Npad, fg8*8)
        h = bn_relu(h, p2_ref[...], pt2_ref[...], g2_ref[...], b2_ref[...],
                    cnt2, mask, sel0, sel1)
        h = dot_bf16(h, m3_ref)                           # (Npad, fg4*16)
        h = bn_relu(h, p3_ref[...], pt3_ref[...], g3_ref[...], b3_ref[...],
                    cnt3, mask, sel0, sel1)
        h = dot_bf16(h, m4_ref)                           # (Npad, fg2*32)
        h = bn_relu(h, p4_ref[...], pt4_ref[...], g4_ref[...], b4_ref[...],
                    cnt4, mask, sel0, sel1)

        # conv5 (+bias) and Linear(64->256, bias=False) folded on the host
        # into one matmul + one bias row (exact: no nonlinearity in between,
        # and the Linear acts per-channel on the length dim).
        h = dot_bf16(h, m5w_ref)                          # (Npad, cimg*256)
        out_ref[...] = jnp.tanh(h + bias5w_ref[...])

    return kernel


# ----------------------------------------------------------------------------
# Host-side glue: lower ConvTranspose1d weights into dense matmul matrices and
# precompute the BN pooling matrices / fused final matmul.
# ----------------------------------------------------------------------------
def convt1d_as_matrix(w, l_in, stride, padding):
    """w: (Cin, Cout, K) -> M: (Cin*Lin, Cout*Lout) with out = in_flat @ M."""
    c_in, c_out, k = w.shape
    l_out = (l_in - 1) * stride - 2 * padding + k
    li = jnp.arange(l_in)
    kk = jnp.arange(k)
    lo = li[:, None] * stride - padding + kk[None, :]                 # (Lin, K)
    valid = (lo >= 0) & (lo < l_out)
    onehot = ((lo[:, :, None] == jnp.arange(l_out)[None, None, :])
              & valid[:, :, None]).astype(jnp.float32)                # (Lin,K,Lout)
    m = jnp.einsum('cok,lkj->cloj', w.astype(jnp.float32), onehot)
    return m.reshape(c_in * l_in, c_out * l_out), l_out


def pooling_matrices(c, l):
    """P (C*L, C): sums each channel's L positions; PT (C, C*L): broadcast back.
    Entries are exactly 0/1, so bf16 storage is lossless."""
    p = jnp.repeat(jnp.eye(c, dtype=jnp.float32), l, axis=0)          # (C*L, C)
    return p.astype(jnp.bfloat16), p.T.astype(jnp.bfloat16)


def build_params(key, channels_noise, channels_img, features_g,
                 num_classes, embed_size):
    fg = features_g
    cin0 = channels_noise + embed_size
    ks = jax.random.split(key, 8)

    def w_init(k, shape, scale=0.1):
        return scale * jax.random.normal(k, shape, dtype=jnp.float32)

    w1 = w_init(ks[0], (cin0, fg * 16, 4))
    w2 = w_init(ks[1], (fg * 16, fg * 8, 4))
    w3 = w_init(ks[2], (fg * 8, fg * 4, 4))
    w4 = w_init(ks[3], (fg * 4, fg * 2, 4))
    w5 = w_init(ks[4], (fg * 2, channels_img, 4))
    bias5 = w_init(ks[5], (channels_img,))
    wlin = w_init(ks[6], (256, 64))                    # (out_features, in_features)
    embed = jax.random.normal(ks[7], (num_classes, embed_size), dtype=jnp.float32)

    m1, l1 = convt1d_as_matrix(w1, 1, 1, 0)            # L: 1 -> 4
    m2, l2 = convt1d_as_matrix(w2, l1, 2, 1)           # 4 -> 8
    m3, l3 = convt1d_as_matrix(w3, l2, 2, 1)           # 8 -> 16
    m4, l4 = convt1d_as_matrix(w4, l3, 2, 1)           # 16 -> 32
    m5, l5 = convt1d_as_matrix(w5, l4, 2, 1)           # 32 -> 64

    # Fold conv5 bias + Linear(64,256,bias=False) into the last matmul (exact).
    wlin_blk = jnp.kron(jnp.eye(channels_img, dtype=jnp.float32), wlin.T)
    bias5_full = jnp.repeat(bias5, l5).reshape(1, channels_img * l5)
    m5w = jnp.dot(m5, wlin_blk)                        # (fg2*32, cimg*256)
    bias5w = jnp.dot(bias5_full, wlin_blk)             # (1, cimg*256)

    def bn(c):  # default PyTorch init: gamma=1, beta=0
        return jnp.ones((1, c), jnp.float32), jnp.zeros((1, c), jnp.float32)

    g1, b1 = bn(fg * 16)
    g2, b2 = bn(fg * 8)
    g3, b3 = bn(fg * 4)
    g4, b4 = bn(fg * 2)
    p1, pt1 = pooling_matrices(fg * 16, l1)
    p2, pt2 = pooling_matrices(fg * 8, l2)
    p3, pt3 = pooling_matrices(fg * 4, l3)
    p4, pt4 = pooling_matrices(fg * 2, l4)

    bf = jnp.bfloat16
    params = dict(embed=embed,
                  m1=m1.astype(bf), m2=m2.astype(bf), m3=m3.astype(bf),
                  m4=m4.astype(bf), m5w=m5w.astype(bf), bias5w=bias5w,
                  p1=p1, pt1=pt1, g1=g1, b1=b1,
                  p2=p2, pt2=pt2, g2=g2, b2=b2,
                  p3=p3, pt3=pt3, g3=g3, b3=b3,
                  p4=p4, pt4=pt4, g4=g4, b4=b4)
    cfg = GenConfig(channels_img=channels_img, out_len=256,
                    bn_lens=(int(l1), int(l2), int(l3), int(l4)))
    return params, cfg


@functools.partial(jax.jit, static_argnames=('cfg',))
def gen_ac_wgan_gp_1d_forward(x, labels, params, cfg):
    # glue: embedding lookup + concat([x, embedding], dim=1) + flatten (L_in=1)
    emb = params['embed'][labels]                      # (N, embed_size)
    x0 = jnp.concatenate([x[:, :, 0], emb], axis=1)    # (N, channels_noise+embed)

    n = x0.shape[0]
    n_pad = max(16, -(-n // 16) * 16)                  # bf16 sublane-tile multiple
    use_mask = (n_pad != n)
    if use_mask:
        x0 = jnp.pad(x0, ((0, n_pad - n), (0, 0)))

    cimg = cfg.channels_img
    out_cols = cimg * cfg.out_len
    kernel = _make_gen_kernel(tuple(n * l for l in cfg.bn_lens), use_mask)

    operands = [x0]
    if use_mask:
        mask = (jnp.arange(n_pad) < n).astype(jnp.float32).reshape(n_pad, 1)
        operands.append(mask)
    operands += [params[k] for k in (
        'm1', 'p1', 'pt1', 'g1', 'b1',
        'm2', 'p2', 'pt2', 'g2', 'b2',
        'm3', 'p3', 'pt3', 'g3', 'b3',
        'm4', 'p4', 'pt4', 'g4', 'b4',
        'm5w', 'bias5w')]

    # VMEM budget + advisory cost estimate (all shapes are static under jit).
    out_bytes = n_pad * out_cols * 4
    operand_bytes = sum(int(a.size) * a.dtype.itemsize for a in operands)
    vmem_limit = int(min(max(2 * (operand_bytes + out_bytes) + (8 << 20),
                             32 << 20), 60 << 20))     # stay under v7x's 64 MiB
    mm_keys = ('m1', 'm2', 'm3', 'm4', 'm5w')
    flops = 2 * n_pad * sum(int(params[k].shape[0]) * int(params[k].shape[1])
                            for k in mm_keys)
    flops += sum(2 * 2 * 2 * int(params[k].shape[0]) * int(params[k].shape[1])
                 for k in ('p1', 'p2', 'p3', 'p4'))    # BN pool + broadcast-back
    transcendentals = n_pad * out_cols + 4 * n_pad     # tanh + rsqrt

    vmem_spec = pl.BlockSpec(memory_space=pltpu.MemorySpace.VMEM)
    out = pl.pallas_call(
        kernel,
        out_shape=jax.ShapeDtypeStruct((n_pad, out_cols), jnp.float32),
        in_specs=[vmem_spec] * len(operands),
        out_specs=vmem_spec,
        compiler_params=pltpu.CompilerParams(vmem_limit_bytes=vmem_limit),
        cost_estimate=pl.CostEstimate(flops=int(flops),
                                      transcendentals=int(transcendentals),
                                      bytes_accessed=int(operand_bytes + out_bytes)),
    )(*operands)

    return out[:n].reshape(n, cimg, cfg.out_len)       # torch (N, C_img, 256)


if __name__ == "__main__":
    channels_noise, channels_img, features_g = 4, 1, 4
    num_classes, img_size, embed_size = 5, 64, 4
    batch = 2

    key = jax.random.PRNGKey(0)
    k_x, k_lab, k_par = jax.random.split(key, 3)

    x = jax.random.normal(k_x, (batch, channels_noise, 1), dtype=jnp.float32)
    labels = jax.random.randint(k_lab, (batch,), 0, num_classes)

    params, cfg = build_params(k_par, channels_noise, channels_img, features_g,
                               num_classes, embed_size)

    out = gen_ac_wgan_gp_1d_forward(x, labels, params, cfg)
    out = jax.block_until_ready(out)

    assert out.shape == (batch, channels_img, 256), out.shape
    assert bool(jnp.all(jnp.isfinite(out)))
    assert bool(jnp.all(jnp.abs(out) <= 1.0 + 1e-6))   # tanh range
    print("KERNEL_OK")
</pallas_src>

<mosaic_0001>
module attributes {stable_mosaic.version = 11 : i64} {
  func.func @kernel(%arg0: memref<16x8xf32, #tpu.memory_space<vmem>>, %arg1: memref<16x1xf32, #tpu.memory_space<vmem>>, %arg2: memref<8x256xbf16, #tpu.memory_space<vmem>>, %arg3: memref<256x64xbf16, #tpu.memory_space<vmem>>, %arg4: memref<64x256xbf16, #tpu.memory_space<vmem>>, %arg5: memref<1x64xf32, #tpu.memory_space<vmem>>, %arg6: memref<1x64xf32, #tpu.memory_space<vmem>>, %arg7: memref<256x256xbf16, #tpu.memory_space<vmem>>, %arg8: memref<256x32xbf16, #tpu.memory_space<vmem>>, %arg9: memref<32x256xbf16, #tpu.memory_space<vmem>>, %arg10: memref<1x32xf32, #tpu.memory_space<vmem>>, %arg11: memref<1x32xf32, #tpu.memory_space<vmem>>, %arg12: memref<256x256xbf16, #tpu.memory_space<vmem>>, %arg13: memref<256x16xbf16, #tpu.memory_space<vmem>>, %arg14: memref<16x256xbf16, #tpu.memory_space<vmem>>, %arg15: memref<1x16xf32, #tpu.memory_space<vmem>>, %arg16: memref<1x16xf32, #tpu.memory_space<vmem>>, %arg17: memref<256x256xbf16, #tpu.memory_space<vmem>>, %arg18: memref<256x8xbf16, #tpu.memory_space<vmem>>, %arg19: memref<8x256xbf16, #tpu.memory_space<vmem>>, %arg20: memref<1x8xf32, #tpu.memory_space<vmem>>, %arg21: memref<1x8xf32, #tpu.memory_space<vmem>>, %arg22: memref<256x256xbf16, #tpu.memory_space<vmem>>, %arg23: memref<1x256xf32, #tpu.memory_space<vmem>>, %arg24: memref<16x256xf32, #tpu.memory_space<vmem>>) attributes {dimension_semantics = [], scalar_prefetch = 0 : i64, scratch_operands = 0 : i64, tpu.core_type = #tpu.core_type<tc>} {
    %c0 = arith.constant 0 : index
    %c0_0 = arith.constant 0 : index
    %0 = vector.load %arg1[%c0, %c0_0] : memref<16x1xf32, #tpu.memory_space<vmem>>, vector<16x1xf32>
    %1 = tpu.iota {dimensions = array<i32: 0>} : vector<2x1xi32>
    %c0_i32 = arith.constant 0 : i32
    %2 = vector.broadcast %c0_i32 : i32 to vector<2x1xi32>
    %3 = arith.cmpi eq, %1, %2 : vector<2x1xi32>
    %4 = arith.extui %3 : vector<2x1xi1> to vector<2x1xi32>
    %5 = arith.sitofp %4 : vector<2x1xi32> to vector<2x1xf32>
    %cst = arith.constant 1.000000e+00 : f32
    %6 = vector.broadcast %cst : f32 to vector<2x1xf32>
    %7 = arith.subf %6, %5 : vector<2x1xf32>
    %c0_1 = arith.constant 0 : index
    %c0_2 = arith.constant 0 : index
    %8 = vector.load %arg0[%c0_1, %c0_2] : memref<16x8xf32, #tpu.memory_space<vmem>>, vector<16x8xf32>
    %9 = arith.truncf %8 : vector<16x8xf32> to vector<16x8xbf16>
    %c0_3 = arith.constant 0 : index
    %c0_4 = arith.constant 0 : index
    %10 = vector.load %arg2[%c0_3, %c0_4] : memref<8x256xbf16, #tpu.memory_space<vmem>>, vector<8x256xbf16>
    %cst_5 = arith.constant dense<0.000000e+00> : vector<16x256xf32>
    %11 = tpu.matmul %9, %10, %cst_5 {dimension_numbers = #tpu.dot_dimension_numbers<[1], [0], [0], [1], [0, 0, 1, 1], [], []>} : vector<16x8xbf16>, vector<8x256xbf16>, vector<16x256xf32> -> vector<16x256xf32>
    %c0_6 = arith.constant 0 : index
    %c0_7 = arith.constant 0 : index
    %12 = vector.load %arg3[%c0_6, %c0_7] : memref<256x64xbf16, #tpu.memory_space<vmem>>, vector<256x64xbf16>
    %c0_8 = arith.constant 0 : index
    %c0_9 = arith.constant 0 : index
    %13 = vector.load %arg4[%c0_8, %c0_9] : memref<64x256xbf16, #tpu.memory_space<vmem>>, vector<64x256xbf16>
    %c0_10 = arith.constant 0 : index
    %c0_11 = arith.constant 0 : index
    %14 = vector.load %arg5[%c0_10, %c0_11] : memref<1x64xf32, #tpu.memory_space<vmem>>, vector<1x64xf32>
    %c0_12 = arith.constant 0 : index
    %c0_13 = arith.constant 0 : index
    %15 = vector.load %arg6[%c0_12, %c0_13] : memref<1x64xf32, #tpu.memory_space<vmem>>, vector<1x64xf32>
    %cst_14 = arith.constant dense<0.000000e+00> : vector<256xf32>
    %16 = vector.multi_reduction <add>, %11, %cst_14 [0] : vector<16x256xf32> to vector<256xf32>
    %17 = vector.shape_cast %16 : vector<256xf32> to vector<1x256xf32>
    %18 = arith.mulf %11, %11 : vector<16x256xf32>
    %cst_15 = arith.constant dense<0.000000e+00> : vector<256xf32>
    %19 = vector.multi_reduction <add>, %18, %cst_15 [0] : vector<16x256xf32> to vector<256xf32>
    %20 = vector.shape_cast %19 : vector<256xf32> to vector<1x256xf32>
    %21 = vector.broadcast %5 : vector<2x1xf32> to vector<2x256xf32>
    %22 = vector.broadcast %17 : vector<1x256xf32> to vector<2x256xf32>
    %23 = arith.mulf %21, %22 : vector<2x256xf32>
    %24 = vector.broadcast %7 : vector<2x1xf32> to vector<2x256xf32>
    %25 = vector.broadcast %20 : vector<1x256xf32> to vector<2x256xf32>
    %26 = arith.mulf %24, %25 : vector<2x256xf32>
    %27 = arith.addf %23, %26 : vector<2x256xf32>
    %28 = arith.extf %12 : vector<256x64xbf16> to vector<256x64xf32>
    %cst_16 = arith.constant dense<0.000000e+00> : vector<2x64xf32>
    %29 = tpu.matmul %27, %28, %cst_16 {dimension_numbers = #tpu.dot_dimension_numbers<[1], [0], [0], [1], [0, 0, 1, 1], [], []>} : vector<2x256xf32>, vector<256x64xf32>, vector<2x64xf32> -> vector<2x64xf32>
    %30 = vector.extract_strided_slice %29 {offsets = [0, 0], sizes = [1, 64], strides = [1, 1]} : vector<2x64xf32> to vector<1x64xf32>
    %cst_17 = arith.constant 8.000000e+00 : f32
    %31 = vector.broadcast %cst_17 : f32 to vector<1x64xf32>
    %32 = arith.divf %30, %31 : vector<1x64xf32>
    %33 = vector.extract_strided_slice %29 {offsets = [1, 0], sizes = [1, 64], strides = [1, 1]} : vector<2x64xf32> to vector<1x64xf32>
    %cst_18 = arith.constant 8.000000e+00 : f32
    %34 = vector.broadcast %cst_18 : f32 to vector<1x64xf32>
    %35 = arith.divf %33, %34 : vector<1x64xf32>
    %36 = arith.mulf %32, %32 : vector<1x64xf32>
    %37 = arith.subf %35, %36 : vector<1x64xf32>
    %cst_19 = arith.constant 0.000000e+00 : f32
    %38 = vector.broadcast %cst_19 : f32 to vector<1x64xf32>
    %39 = arith.maximumf %37, %38 : vector<1x64xf32>
    %cst_20 = arith.constant 9.99999974E-6 : f32
    %40 = vector.broadcast %cst_20 : f32 to vector<1x64xf32>
    %41 = arith.addf %39, %40 : vector<1x64xf32>
    %42 = math.rsqrt %41 : vector<1x64xf32>
    %43 = arith.mulf %14, %42 : vector<1x64xf32>
    %44 = arith.mulf %32, %43 : vector<1x64xf32>
    %45 = arith.subf %15, %44 : vector<1x64xf32>
    %46 = vector.broadcast %5 : vector<2x1xf32> to vector<2x64xf32>
    %47 = vector.broadcast %43 : vector<1x64xf32> to vector<2x64xf32>
    %48 = arith.mulf %46, %47 : vector<2x64xf32>
    %49 = vector.broadcast %7 : vector<2x1xf32> to vector<2x64xf32>
    %50 = vector.broadcast %45 : vector<1x64xf32> to vector<2x64xf32>
    %51 = arith.mulf %49, %50 : vector<2x64xf32>
    %52 = arith.addf %48, %51 : vector<2x64xf32>
    %53 = arith.extf %13 : vector<64x256xbf16> to vector<64x256xf32>
    %cst_21 = arith.constant dense<0.000000e+00> : vector<2x256xf32>
    %54 = tpu.matmul %52, %53, %cst_21 {dimension_numbers = #tpu.dot_dimension_numbers<[1], [0], [0], [1], [0, 0, 1, 1], [], []>} : vector<2x64xf32>, vector<64x256xf32>, vector<2x256xf32> -> vector<2x256xf32>
    %55 = vector.extract_strided_slice %54 {offsets = [0, 0], sizes = [1, 256], strides = [1, 1]} : vector<2x256xf32> to vector<1x256xf32>
    %56 = vector.broadcast %55 : vector<1x256xf32> to vector<16x256xf32>
    %57 = arith.mulf %11, %56 : vector<16x256xf32>
    %58 = vector.extract_strided_slice %54 {offsets = [1, 0], sizes = [1, 256], strides = [1, 1]} : vector<2x256xf32> to vector<1x256xf32>
    %59 = vector.broadcast %58 : vector<1x256xf32> to vector<16x256xf32>
    %60 = arith.addf %57, %59 : vector<16x256xf32>
    %cst_22 = arith.constant 0.000000e+00 : f32
    %61 = vector.broadcast %cst_22 : f32 to vector<16x256xf32>
    %62 = arith.maximumf %60, %61 : vector<16x256xf32>
    %63 = vector.broadcast %0 : vector<16x1xf32> to vector<16x256xf32>
    %64 = arith.mulf %62, %63 : vector<16x256xf32>
    %65 = arith.truncf %64 : vector<16x256xf32> to vector<16x256xbf16>
    %c0_23 = arith.constant 0 : index
    %c0_24 = arith.constant 0 : index
    %66 = vector.load %arg7[%c0_23, %c0_24] : memref<256x256xbf16, #tpu.memory_space<vmem>>, vector<256x256xbf16>
    %cst_25 = arith.constant dense<0.000000e+00> : vector<16x256xf32>
    %67 = tpu.matmul %65, %66, %cst_25 {dimension_numbers = #tpu.dot_dimension_numbers<[1], [0], [0], [1], [0, 0, 1, 1], [], []>} : vector<16x256xbf16>, vector<256x256xbf16>, vector<16x256xf32> -> vector<16x256xf32>
    %c0_26 = arith.constant 0 : index
    %c0_27 = arith.constant 0 : index
    %68 = vector.load %arg8[%c0_26, %c0_27] : memref<256x32xbf16, #tpu.memory_space<vmem>>, vector<256x32xbf16>
    %c0_28 = arith.constant 0 : index
    %c0_29 = arith.constant 0 : index
    %69 = vector.load %arg9[%c0_28, %c0_29] : memref<32x256xbf16, #tpu.memory_space<vmem>>, vector<32x256xbf16>
    %c0_30 = arith.constant 0 : index
    %c0_31 = arith.constant 0 : index
    %70 = vector.load %arg10[%c0_30, %c0_31] : memref<1x32xf32, #tpu.memory_space<vmem>>, vector<1x32xf32>
    %c0_32 = arith.constant 0 : index
    %c0_33 = arith.constant 0 : index
    %71 = vector.load %arg11[%c0_32, %c0_33] : memref<1x32xf32, #tpu.memory_space<vmem>>, vector<1x32xf32>
    %cst_34 = arith.constant dense<0.000000e+00> : vector<256xf32>
    %72 = vector.multi_reduction <add>, %67, %cst_34 [0] : vector<16x256xf32> to vector<256xf32>
    %73 = vector.shape_cast %72 : vector<256xf32> to vector<1x256xf32>
    %74 = arith.mulf %67, %67 : vector<16x256xf32>
    %cst_35 = arith.constant dense<0.000000e+00> : vector<256xf32>
    %75 = vector.multi_reduction <add>, %74, %cst_35 [0] : vector<16x256xf32> to vector<256xf32>
    %76 = vector.shape_cast %75 : vector<256xf32> to vector<1x256xf32>
    %77 = vector.broadcast %5 : vector<2x1xf32> to vector<2x256xf32>
    %78 = vector.broadcast %73 : vector<1x256xf32> to vector<2x256xf32>
    %79 = arith.mulf %77, %78 : vector<2x256xf32>
    %80 = vector.broadcast %7 : vector<2x1xf32> to vector<2x256xf32>
    %81 = vector.broadcast %76 : vector<1x256xf32> to vector<2x256xf32>
    %82 = arith.mulf %80, %81 : vector<2x256xf32>
    %83 = arith.addf %79, %82 : vector<2x256xf32>
    %84 = arith.extf %68 : vector<256x32xbf16> to vector<256x32xf32>
    %cst_36 = arith.constant dense<0.000000e+00> : vector<2x32xf32>
    %85 = tpu.matmul %83, %84, %cst_36 {dimension_numbers = #tpu.dot_dimension_numbers<[1], [0], [0], [1], [0, 0, 1, 1], [], []>} : vector<2x256xf32>, vector<256x32xf32>, vector<2x32xf32> -> vector<2x32xf32>
    %86 = vector.extract_strided_slice %85 {offsets = [0, 0], sizes = [1, 32], strides = [1, 1]} : vector<2x32xf32> to vector<1x32xf32>
    %cst_37 = arith.constant 1.600000e+01 : f32
    %87 = vector.broadcast %cst_37 : f32 to vector<1x32xf32>
    %88 = arith.divf %86, %87 : vector<1x32xf32>
    %89 = vector.extract_strided_slice %85 {offsets = [1, 0], sizes = [1, 32], strides = [1, 1]} : vector<2x32xf32> to vector<1x32xf32>
    %cst_38 = arith.constant 1.600000e+01 : f32
    %90 = vector.broadcast %cst_38 : f32 to vector<1x32xf32>
    %91 = arith.divf %89, %90 : vector<1x32xf32>
    %92 = arith.mulf %88, %88 : vector<1x32xf32>
    %93 = arith.subf %91, %92 : vector<1x32xf32>
    %cst_39 = arith.constant 0.000000e+00 : f32
    %94 = vector.broadcast %cst_39 : f32 to vector<1x32xf32>
    %95 = arith.maximumf %93, %94 : vector<1x32xf32>
    %cst_40 = arith.constant 9.99999974E-6 : f32
    %96 = vector.broadcast %cst_40 : f32 to vector<1x32xf32>
    %97 = arith.addf %95, %96 : vector<1x32xf32>
    %98 = math.rsqrt %97 : vector<1x32xf32>
    %99 = arith.mulf %70, %98 : vector<1x32xf32>
    %100 = arith.mulf %88, %99 : vector<1x32xf32>
    %101 = arith.subf %71, %100 : vector<1x32xf32>
    %102 = vector.broadcast %5 : vector<2x1xf32> to vector<2x32xf32>
    %103 = vector.broadcast %99 : vector<1x32xf32> to vector<2x32xf32>
    %104 = arith.mulf %102, %103 : vector<2x32xf32>
    %105 = vector.broadcast %7 : vector<2x1xf32> to vector<2x32xf32>
    %106 = vector.broadcast %101 : vector<1x32xf32> to vector<2x32xf32>
    %107 = arith.mulf %105, %106 : vector<2x32xf32>
    %108 = arith.addf %104, %107 : vector<2x32xf32>
    %109 = arith.extf %69 : vector<32x256xbf16> to vector<32x256xf32>
    %cst_41 = arith.constant dense<0.000000e+00> : vector<2x256xf32>
    %110 = tpu.matmul %108, %109, %cst_41 {dimension_numbers = #tpu.dot_dimension_numbers<[1], [0], [0], [1], [0, 0, 1, 1], [], []>} : vector<2x32xf32>, vector<32x256xf32>, vector<2x256xf32> -> vector<2x256xf32>
    %111 = vector.extract_strided_slice %110 {offsets = [0, 0], sizes = [1, 256], strides = [1, 1]} : vector<2x256xf32> to vector<1x256xf32>
    %112 = vector.broadcast %111 : vector<1x256xf32> to vector<16x256xf32>
    %113 = arith.mulf %67, %112 : vector<16x256xf32>
    %114 = vector.extract_strided_slice %110 {offsets = [1, 0], sizes = [1, 256], strides = [1, 1]} : vector<2x256xf32> to vector<1x256xf32>
    %115 = vector.broadcast %114 : vector<1x256xf32> to vector<16x256xf32>
    %116 = arith.addf %113, %115 : vector<16x256xf32>
    %cst_42 = arith.constant 0.000000e+00 : f32
    %117 = vector.broadcast %cst_42 : f32 to vector<16x256xf32>
    %118 = arith.maximumf %116, %117 : vector<16x256xf32>
    %119 = vector.broadcast %0 : vector<16x1xf32> to vector<16x256xf32>
    %120 = arith.mulf %118, %119 : vector<16x256xf32>
    %121 = arith.truncf %120 : vector<16x256xf32> to vector<16x256xbf16>
    %c0_43 = arith.constant 0 : index
    %c0_44 = arith.constant 0 : index
    %122 = vector.load %arg12[%c0_43, %c0_44] : memref<256x256xbf16, #tpu.memory_space<vmem>>, vector<256x256xbf16>
    %cst_45 = arith.constant dense<0.000000e+00> : vector<16x256xf32>
    %123 = tpu.matmul %121, %122, %cst_45 {dimension_numbers = #tpu.dot_dimension_numbers<[1], [0], [0], [1], [0, 0, 1, 1], [], []>} : vector<16x256xbf16>, vector<256x256xbf16>, vector<16x256xf32> -> vector<16x256xf32>
    %c0_46 = arith.constant 0 : index
    %c0_47 = arith.constant 0 : index
    %124 = vector.load %arg13[%c0_46, %c0_47] : memref<256x16xbf16, #tpu.memory_space<vmem>>, vector<256x16xbf16>
    %c0_48 = arith.constant 0 : index
    %c0_49 = arith.constant 0 : index
    %125 = vector.load %arg14[%c0_48, %c0_49] : memref<16x256xbf16, #tpu.memory_space<vmem>>, vector<16x256xbf16>
    %c0_50 = arith.constant 0 : index
    %c0_51 = arith.constant 0 : index
    %126 = vector.load %arg15[%c0_50, %c0_51] : memref<1x16xf32, #tpu.memory_space<vmem>>, vector<1x16xf32>
    %c0_52 = arith.constant 0 : index
    %c0_53 = arith.constant 0 : index
    %127 = vector.load %arg16[%c0_52, %c0_53] : memref<1x16xf32, #tpu.memory_space<vmem>>, vector<1x16xf32>
    %cst_54 = arith.constant dense<0.000000e+00> : vector<256xf32>
    %128 = vector.multi_reduction <add>, %123, %cst_54 [0] : vector<16x256xf32> to vector<256xf32>
    %129 = vector.shape_cast %128 : vector<256xf32> to vector<1x256xf32>
    %130 = arith.mulf %123, %123 : vector<16x256xf32>
    %cst_55 = arith.constant dense<0.000000e+00> : vector<256xf32>
    %131 = vector.multi_reduction <add>, %130, %cst_55 [0] : vector<16x256xf32> to vector<256xf32>
    %132 = vector.shape_cast %131 : vector<256xf32> to vector<1x256xf32>
    %133 = vector.broadcast %5 : vector<2x1xf32> to vector<2x256xf32>
    %134 = vector.broadcast %129 : vector<1x256xf32> to vector<2x256xf32>
    %135 = arith.mulf %133, %134 : vector<2x256xf32>
    %136 = vector.broadcast %7 : vector<2x1xf32> to vector<2x256xf32>
    %137 = vector.broadcast %132 : vector<1x256xf32> to vector<2x256xf32>
    %138 = arith.mulf %136, %137 : vector<2x256xf32>
    %139 = arith.addf %135, %138 : vector<2x256xf32>
    %140 = arith.extf %124 : vector<256x16xbf16> to vector<256x16xf32>
    %cst_56 = arith.constant dense<0.000000e+00> : vector<2x16xf32>
    %141 = tpu.matmul %139, %140, %cst_56 {dimension_numbers = #tpu.dot_dimension_numbers<[1], [0], [0], [1], [0, 0, 1, 1], [], []>} : vector<2x256xf32>, vector<256x16xf32>, vector<2x16xf32> -> vector<2x16xf32>
    %142 = vector.extract_strided_slice %141 {offsets = [0, 0], sizes = [1, 16], strides = [1, 1]} : vector<2x16xf32> to vector<1x16xf32>
    %cst_57 = arith.constant 3.200000e+01 : f32
    %143 = vector.broadcast %cst_57 : f32 to vector<1x16xf32>
    %144 = arith.divf %142, %143 : vector<1x16xf32>
    %145 = vector.extract_strided_slice %141 {offsets = [1, 0], sizes = [1, 16], strides = [1, 1]} : vector<2x16xf32> to vector<1x16xf32>
    %cst_58 = arith.constant 3.200000e+01 : f32
    %146 = vector.broadcast %cst_58 : f32 to vector<1x16xf32>
    %147 = arith.divf %145, %146 : vector<1x16xf32>
    %148 = arith.mulf %144, %144 : vector<1x16xf32>
    %149 = arith.subf %147, %148 : vector<1x16xf32>
    %cst_59 = arith.constant 0.000000e+00 : f32
    %150 = vector.broadcast %cst_59 : f32 to vector<1x16xf32>
    %151 = arith.maximumf %149, %150 : vector<1x16xf32>
    %cst_60 = arith.constant 9.99999974E-6 : f32
    %152 = vector.broadcast %cst_60 : f32 to vector<1x16xf32>
    %153 = arith.addf %151, %152 : vector<1x16xf32>
    %154 = math.rsqrt %153 : vector<1x16xf32>
    %155 = arith.mulf %126, %154 : vector<1x16xf32>
    %156 = arith.mulf %144, %155 : vector<1x16xf32>
    %157 = arith.subf %127, %156 : vector<1x16xf32>
    %158 = vector.broadcast %5 : vector<2x1xf32> to vector<2x16xf32>
    %159 = vector.broadcast %155 : vector<1x16xf32> to vector<2x16xf32>
    %160 = arith.mulf %158, %159 : vector<2x16xf32>
    %161 = vector.broadcast %7 : vector<2x1xf32> to vector<2x16xf32>
    %162 = vector.broadcast %157 : vector<1x16xf32> to vector<2x16xf32>
    %163 = arith.mulf %161, %162 : vector<2x16xf32>
    %164 = arith.addf %160, %163 : vector<2x16xf32>
    %165 = arith.extf %125 : vector<16x256xbf16> to vector<16x256xf32>
    %cst_61 = arith.constant dense<0.000000e+00> : vector<2x256xf32>
    %166 = tpu.matmul %164, %165, %cst_61 {dimension_numbers = #tpu.dot_dimension_numbers<[1], [0], [0], [1], [0, 0, 1, 1], [], []>} : vector<2x16xf32>, vector<16x256xf32>, vector<2x256xf32> -> vector<2x256xf32>
    %167 = vector.extract_strided_slice %166 {offsets = [0, 0], sizes = [1, 256], strides = [1, 1]} : vector<2x256xf32> to vector<1x256xf32>
    %168 = vector.broadcast %167 : vector<1x256xf32> to vector<16x256xf32>
    %169 = arith.mulf %123, %168 : vector<16x256xf32>
    %170 = vector.extract_strided_slice %166 {offsets = [1, 0], sizes = [1, 256], strides = [1, 1]} : vector<2x256xf32> to vector<1x256xf32>
    %171 = vector.broadcast %170 : vector<1x256xf32> to vector<16x256xf32>
    %172 = arith.addf %169, %171 : vector<16x256xf32>
    %cst_62 = arith.constant 0.000000e+00 : f32
    %173 = vector.broadcast %cst_62 : f32 to vector<16x256xf32>
    %174 = arith.maximumf %172, %173 : vector<16x256xf32>
    %175 = vector.broadcast %0 : vector<16x1xf32> to vector<16x256xf32>
    %176 = arith.mulf %174, %175 : vector<16x256xf32>
    %177 = arith.truncf %176 : vector<16x256xf32> to vector<16x256xbf16>
    %c0_63 = arith.constant 0 : index
    %c0_64 = arith.constant 0 : index
    %178 = vector.load %arg17[%c0_63, %c0_64] : memref<256x256xbf16, #tpu.memory_space<vmem>>, vector<256x256xbf16>
    %cst_65 = arith.constant dense<0.000000e+00> : vector<16x256xf32>
    %179 = tpu.matmul %177, %178, %cst_65 {dimension_numbers = #tpu.dot_dimension_numbers<[1], [0], [0], [1], [0, 0, 1, 1], [], []>} : vector<16x256xbf16>, vector<256x256xbf16>, vector<16x256xf32> -> vector<16x256xf32>
    %c0_66 = arith.constant 0 : index
    %c0_67 = arith.constant 0 : index
    %180 = vector.load %arg18[%c0_66, %c0_67] : memref<256x8xbf16, #tpu.memory_space<vmem>>, vector<256x8xbf16>
    %c0_68 = arith.constant 0 : index
    %c0_69 = arith.constant 0 : index
    %181 = vector.load %arg19[%c0_68, %c0_69] : memref<8x256xbf16, #tpu.memory_space<vmem>>, vector<8x256xbf16>
    %c0_70 = arith.constant 0 : index
    %c0_71 = arith.constant 0 : index
    %182 = vector.load %arg20[%c0_70, %c0_71] : memref<1x8xf32, #tpu.memory_space<vmem>>, vector<1x8xf32>
    %c0_72 = arith.constant 0 : index
    %c0_73 = arith.constant 0 : index
    %183 = vector.load %arg21[%c0_72, %c0_73] : memref<1x8xf32, #tpu.memory_space<vmem>>, vector<1x8xf32>
    %cst_74 = arith.constant dense<0.000000e+00> : vector<256xf32>
    %184 = vector.multi_reduction <add>, %179, %cst_74 [0] : vector<16x256xf32> to vector<256xf32>
    %185 = vector.shape_cast %184 : vector<256xf32> to vector<1x256xf32>
    %186 = arith.mulf %179, %179 : vector<16x256xf32>
    %cst_75 = arith.constant dense<0.000000e+00> : vector<256xf32>
    %187 = vector.multi_reduction <add>, %186, %cst_75 [0] : vector<16x256xf32> to vector<256xf32>
    %188 = vector.shape_cast %187 : vector<256xf32> to vector<1x256xf32>
    %189 = vector.broadcast %5 : vector<2x1xf32> to vector<2x256xf32>
    %190 = vector.broadcast %185 : vector<1x256xf32> to vector<2x256xf32>
    %191 = arith.mulf %189, %190 : vector<2x256xf32>
    %192 = vector.broadcast %7 : vector<2x1xf32> to vector<2x256xf32>
    %193 = vector.broadcast %188 : vector<1x256xf32> to vector<2x256xf32>
    %194 = arith.mulf %192, %193 : vector<2x256xf32>
    %195 = arith.addf %191, %194 : vector<2x256xf32>
    %196 = arith.extf %180 : vector<256x8xbf16> to vector<256x8xf32>
    %cst_76 = arith.constant dense<0.000000e+00> : vector<2x8xf32>
    %197 = tpu.matmul %195, %196, %cst_76 {dimension_numbers = #tpu.dot_dimension_numbers<[1], [0], [0], [1], [0, 0, 1, 1], [], []>} : vector<2x256xf32>, vector<256x8xf32>, vector<2x8xf32> -> vector<2x8xf32>
    %198 = vector.extract_strided_slice %197 {offsets = [0, 0], sizes = [1, 8], strides = [1, 1]} : vector<2x8xf32> to vector<1x8xf32>
    %cst_77 = arith.constant 6.400000e+01 : f32
    %199 = vector.broadcast %cst_77 : f32 to vector<1x8xf32>
    %200 = arith.divf %198, %199 : vector<1x8xf32>
    %201 = vector.extract_strided_slice %197 {offsets = [1, 0], sizes = [1, 8], strides = [1, 1]} : vector<2x8xf32> to vector<1x8xf32>
    %cst_78 = arith.constant 6.400000e+01 : f32
    %202 = vector.broadcast %cst_78 : f32 to vector<1x8xf32>
    %203 = arith.divf %201, %202 : vector<1x8xf32>
    %204 = arith.mulf %200, %200 : vector<1x8xf32>
    %205 = arith.subf %203, %204 : vector<1x8xf32>
    %cst_79 = arith.constant 0.000000e+00 : f32
    %206 = vector.broadcast %cst_79 : f32 to vector<1x8xf32>
    %207 = arith.maximumf %205, %206 : vector<1x8xf32>
    %cst_80 = arith.constant 9.99999974E-6 : f32
    %208 = vector.broadcast %cst_80 : f32 to vector<1x8xf32>
    %209 = arith.addf %207, %208 : vector<1x8xf32>
    %210 = math.rsqrt %209 : vector<1x8xf32>
    %211 = arith.mulf %182, %210 : vector<1x8xf32>
    %212 = arith.mulf %200, %211 : vector<1x8xf32>
    %213 = arith.subf %183, %212 : vector<1x8xf32>
    %214 = vector.broadcast %5 : vector<2x1xf32> to vector<2x8xf32>
    %215 = vector.broadcast %211 : vector<1x8xf32> to vector<2x8xf32>
    %216 = arith.mulf %214, %215 : vector<2x8xf32>
    %217 = vector.broadcast %7 : vector<2x1xf32> to vector<2x8xf32>
    %218 = vector.broadcast %213 : vector<1x8xf32> to vector<2x8xf32>
    %219 = arith.mulf %217, %218 : vector<2x8xf32>
    %220 = arith.addf %216, %219 : vector<2x8xf32>
    %221 = arith.extf %181 : vector<8x256xbf16> to vector<8x256xf32>
    %cst_81 = arith.constant dense<0.000000e+00> : vector<2x256xf32>
    %222 = tpu.matmul %220, %221, %cst_81 {dimension_numbers = #tpu.dot_dimension_numbers<[1], [0], [0], [1], [0, 0, 1, 1], [], []>} : vector<2x8xf32>, vector<8x256xf32>, vector<2x256xf32> -> vector<2x256xf32>
    %223 = vector.extract_strided_slice %222 {offsets = [0, 0], sizes = [1, 256], strides = [1, 1]} : vector<2x256xf32> to vector<1x256xf32>
    %224 = vector.broadcast %223 : vector<1x256xf32> to vector<16x256xf32>
    %225 = arith.mulf %179, %224 : vector<16x256xf32>
    %226 = vector.extract_strided_slice %222 {offsets = [1, 0], sizes = [1, 256], strides = [1, 1]} : vector<2x256xf32> to vector<1x256xf32>
    %227 = vector.broadcast %226 : vector<1x256xf32> to vector<16x256xf32>
    %228 = arith.addf %225, %227 : vector<16x256xf32>
    %cst_82 = arith.constant 0.000000e+00 : f32
    %229 = vector.broadcast %cst_82 : f32 to vector<16x256xf32>
    %230 = arith.maximumf %228, %229 : vector<16x256xf32>
    %231 = vector.broadcast %0 : vector<16x1xf32> to vector<16x256xf32>
    %232 = arith.mulf %230, %231 : vector<16x256xf32>
    %233 = arith.truncf %232 : vector<16x256xf32> to vector<16x256xbf16>
    %c0_83 = arith.constant 0 : index
    %c0_84 = arith.constant 0 : index
    %234 = vector.load %arg22[%c0_83, %c0_84] : memref<256x256xbf16, #tpu.memory_space<vmem>>, vector<256x256xbf16>
    %cst_85 = arith.constant dense<0.000000e+00> : vector<16x256xf32>
    %235 = tpu.matmul %233, %234, %cst_85 {dimension_numbers = #tpu.dot_dimension_numbers<[1], [0], [0], [1], [0, 0, 1, 1], [], []>} : vector<16x256xbf16>, vector<256x256xbf16>, vector<16x256xf32> -> vector<16x256xf32>
    %c0_86 = arith.constant 0 : index
    %c0_87 = arith.constant 0 : index
    %236 = vector.load %arg23[%c0_86, %c0_87] : memref<1x256xf32, #tpu.memory_space<vmem>>, vector<1x256xf32>
    %237 = vector.broadcast %236 : vector<1x256xf32> to vector<16x256xf32>
    %238 = arith.addf %235, %237 : vector<16x256xf32>
    %239 = math.tanh %238 : vector<16x256xf32>
    %c0_88 = arith.constant 0 : index
    %c0_89 = arith.constant 0 : index
    %240 = vector.load %arg24[%c0_88, %c0_89] : memref<16x256xf32, #tpu.memory_space<vmem>>, vector<16x256xf32>
    tpu.vector_store %arg24[%c0_88, %c0_89], %239 {strides = array<i32>} : memref<16x256xf32, #tpu.memory_space<vmem>>, vector<16x256xf32>,
    return
  }
}

</mosaic_0001>

<llo_original>
// kernel: gen_ac_wgan_gp_1d_forward.1
$region0: #{gen_ac_wgan_gp_1d_forward.1}
  #allocation0 [shape = 'u32[]', space=smem, size = 0x4, offset = 0x4, fixed_abs, tag = 'smem constant byte address 0x4 - core index']
  #allocation1 [shape = 'u32[144,128]{1,0:T(1,128)}', space=vmem, size = 0x12000, scoped, tag = 'internal scratch']
  %s0 = inlined_call_operand.vmem [shape: f32[16,8], index: 0, kind: input, shape index: {}]
  %s1 = inlined_call_operand.vmem [shape: f32[16,1], index: 1, kind: input, shape index: {}]
  %s2 = inlined_call_operand.hbm [shape: bf16[8,256], index: 2, kind: input, shape index: {}]
  %s3 = inlined_call_operand.vmem [shape: bf16[256,64], index: 3, kind: input, shape index: {}]
  %s4 = inlined_call_operand.vmem [shape: bf16[64,256], index: 4, kind: input, shape index: {}]
  %s5 = inlined_call_operand.hbm [shape: f32[1,64], index: 5, kind: input, shape index: {}]
  %s6 = inlined_call_operand.hbm [shape: f32[1,64], index: 6, kind: input, shape index: {}]
  %s7 = inlined_call_operand.vmem [shape: bf16[256,256], index: 7, kind: input, shape index: {}]
  %s8 = inlined_call_operand.vmem [shape: bf16[256,32], index: 8, kind: input, shape index: {}]
  %s9 = inlined_call_operand.vmem [shape: bf16[32,256], index: 9, kind: input, shape index: {}]
  %s10 = inlined_call_operand.hbm [shape: f32[1,32], index: 10, kind: input, shape index: {}]
  %s11 = inlined_call_operand.hbm [shape: f32[1,32], index: 11, kind: input, shape index: {}]
  %s12 = inlined_call_operand.vmem [shape: bf16[256,256], index: 12, kind: input, shape index: {}]
  %s13 = inlined_call_operand.vmem [shape: bf16[256,16], index: 13, kind: input, shape index: {}]
  %s14 = inlined_call_operand.vmem [shape: bf16[16,256], index: 14, kind: input, shape index: {}]
  %s15 = inlined_call_operand.hbm [shape: f32[1,16], index: 15, kind: input, shape index: {}]
  %s16 = inlined_call_operand.hbm [shape: f32[1,16], index: 16, kind: input, shape index: {}]
  %s17 = inlined_call_operand.hbm [shape: bf16[256,256], index: 17, kind: input, shape index: {}]
  %s18 = inlined_call_operand.vmem [shape: bf16[256,8], index: 18, kind: input, shape index: {}]
  %s19 = inlined_call_operand.vmem [shape: bf16[8,256], index: 19, kind: input, shape index: {}]
  %s20 = inlined_call_operand.hbm [shape: f32[1,8], index: 20, kind: input, shape index: {}]
  %s21 = inlined_call_operand.hbm [shape: f32[1,8], index: 21, kind: input, shape index: {}]
  %s22 = inlined_call_operand.hbm [shape: bf16[256,256], index: 22, kind: input, shape index: {}]
  %s23 = inlined_call_operand.hbm [shape: f32[1,256], index: 23, kind: input, shape index: {}]
  %s24 = inlined_call_operand.vmem [shape: f32[16,256], index: 24, kind: output, shape index: {}]
  %s25 = sld [smem:[#allocation0]]
  $region154: #{gen_ac_wgan_gp_1d_forward.1} parent=0
    _
  %s27 = ssub.s32 1, %s25
  %s28 = scalar_select 0, %s27, %s25
  $region1: #{gen_ac_wgan_gp_1d_forward.1} parent=0
    #allocation2 [shape = 'u8[4096]{0}', space=vmem, size = 0x1000, scoped, tag = 'input window, operand 2, single buffered']
    #allocation3 [shape = 's32[1]{0}', space=sflag, size = 0x4, scoped, tag = 'scoped memory for gen_ac_wgan_gp_1d_forward.1']
    #allocation4 [shape = 'u8[512]{0}', space=vmem, size = 0x400, scoped, tag = 'input window, operand 5, single buffered']
    #allocation5 [shape = 's32[1]{0}', space=sflag, size = 0x4, scoped, tag = 'scoped memory for gen_ac_wgan_gp_1d_forward.1']
    #allocation6 [shape = 'u8[512]{0}', space=vmem, size = 0x400, scoped, tag = 'input window, operand 6, single buffered']
    #allocation7 [shape = 'u8[512]{0}', space=vmem, size = 0x400, scoped, tag = 'input window, operand 10, single buffered']
    #allocation8 [shape = 's32[1]{0}', space=sflag, size = 0x4, scoped, tag = 'scoped memory for gen_ac_wgan_gp_1d_forward.1']
    #allocation9 [shape = 'u8[512]{0}', space=vmem, size = 0x400, scoped, tag = 'input window, operand 11, single buffered']
    #allocation10 [shape = 'u8[512]{0}', space=vmem, size = 0x400, scoped, tag = 'input window, operand 15, single buffered']
    #allocation11 [shape = 's32[1]{0}', space=sflag, size = 0x4, scoped, tag = 'scoped memory for gen_ac_wgan_gp_1d_forward.1']
    #allocation12 [shape = 'u8[512]{0}', space=vmem, size = 0x400, scoped, tag = 'input window, operand 16, single buffered']
    #allocation13 [shape = 'u8[131072]{0}', space=vmem, size = 0x20000, scoped, tag = 'input window, operand 17, single buffered']
    #allocation14 [shape = 's32[1]{0}', space=sflag, size = 0x4, scoped, tag = 'scoped memory for gen_ac_wgan_gp_1d_forward.1']
    #allocation15 [shape = 'u8[512]{0}', space=vmem, size = 0x400, scoped, tag = 'input window, operand 20, single buffered']
    #allocation16 [shape = 'u8[512]{0}', space=vmem, size = 0x400, scoped, tag = 'input window, operand 21, single buffered']
    #allocation17 [shape = 's32[1]{0}', space=sflag, size = 0x4, scoped, tag = 'scoped memory for gen_ac_wgan_gp_1d_forward.1']
    #allocation18 [shape = 'u8[131072]{0}', space=vmem, size = 0x20000, scoped, tag = 'input window, operand 22, single buffered']
    #allocation19 [shape = 'u8[1024]{0}', space=vmem, size = 0x400, scoped, tag = 'input window, operand 23, single buffered']
    #allocation20 [shape = 's32[1]{0}', space=sflag, size = 0x4, scoped, tag = 'scoped memory for gen_ac_wgan_gp_1d_forward.1']
    %29 = vsyncpa [#allocation3], 0
    %30 = vsyncpa [#allocation5], 0
    %31 = vsyncpa [#allocation8], 0
    %32 = vsyncpa [#allocation11], 0
    %33 = vsyncpa [#allocation14], 0
    %34 = vsyncpa [#allocation17], 0
    %35 = vsyncpa [#allocation20], 0
    // Predicated region
    $region2: #{gen_ac_wgan_gp_1d_forward.1} parent=1 // pred_check
      _
    $region3: #{gen_ac_wgan_gp_1d_forward.1} parent=1 // pred_check_branch
      %37 = sbr.rel (0) target = $region5
    $region4: #{gen_ac_wgan_gp_1d_forward.1} parent=1 // pred_region
      _
    $region5: #{gen_ac_wgan_gp_1d_forward.1} parent=1 // pred_fallthru
      _
    // Predicated region
    $region6: #{gen_ac_wgan_gp_1d_forward.1} parent=1 // pred_check
      _
    $region7: #{gen_ac_wgan_gp_1d_forward.1} parent=1 // pred_check_branch
      %39 = sbr.rel (0) target = $region9
    $region8: #{gen_ac_wgan_gp_1d_forward.1} parent=1 // pred_region
      _
    $region9: #{gen_ac_wgan_gp_1d_forward.1} parent=1 // pred_fallthru
      _
    // Predicated region
    $region10: #{gen_ac_wgan_gp_1d_forward.1} parent=1 // pred_check
      _
    $region11: #{gen_ac_wgan_gp_1d_forward.1} parent=1 // pred_check_branch
      %41 = sbr.rel (0) target = $region13
    $region12: #{gen_ac_wgan_gp_1d_forward.1} parent=1 // pred_region
      %s43 = ssub.s32 128, 128
      %44 = vsyncadd [#allocation3], %s43
      %s46 = sshll.u32 [#allocation2], 4
      %s47 = int_to_ptr.vmem [resolvable:$true] %s46
      %49 = dma.hbm_to_vmem [thread:$0]  %s2, 128, %s47, [#allocation3]
    $region13: #{gen_ac_wgan_gp_1d_forward.1} parent=1 // pred_fallthru
      _
    // Predicated region
    $region14: #{gen_ac_wgan_gp_1d_forward.1} parent=1 // pred_check
      _
    $region15: #{gen_ac_wgan_gp_1d_forward.1} parent=1 // pred_check_branch
      %51 = sbr.rel (0) target = $region17
    $region16: #{gen_ac_wgan_gp_1d_forward.1} parent=1 // pred_region
      _
    $region17: #{gen_ac_wgan_gp_1d_forward.1} parent=1 // pred_fallthru
      _
    // Predicated region
    $region18: #{gen_ac_wgan_gp_1d_forward.1} parent=1 // pred_check
      _
    $region19: #{gen_ac_wgan_gp_1d_forward.1} parent=1 // pred_check_branch
      %53 = sbr.rel (0) target = $region21
    $region20: #{gen_ac_wgan_gp_1d_forward.1} parent=1 // pred_region
      _
    $region21: #{gen_ac_wgan_gp_1d_forward.1} parent=1 // pred_fallthru
      _
    // Predicated region
    $region22: #{gen_ac_wgan_gp_1d_forward.1} parent=1 // pred_check
      _
    $region23: #{gen_ac_wgan_gp_1d_forward.1} parent=1 // pred_check_branch
      %55 = sbr.rel (0) target = $region25
    $region24: #{gen_ac_wgan_gp_1d_forward.1} parent=1 // pred_region
      %s57 = ssub.s32 16, 16
      %58 = vsyncadd [#allocation5], %s57
      %s60 = sshll.u32 [#allocation4], 4
      %s61 = int_to_ptr.vmem [resolvable:$true] %s60
      %63 = dma.hbm_to_vmem [thread:$0]  %s5, 16, %s61, [#allocation5]
    $region25: #{gen_ac_wgan_gp_1d_forward.1} parent=1 // pred_fallthru
      _
    // Predicated region
    $region26: #{gen_ac_wgan_gp_1d_forward.1} parent=1 // pred_check
      _
    $region27: #{gen_ac_wgan_gp_1d_forward.1} parent=1 // pred_check_branch
      %65 = sbr.rel (0) target = $region29
    $region28: #{gen_ac_wgan_gp_1d_forward.1} parent=1 // pred_region
      %s67 = ssub.s32 16, 16
      %68 = vsyncadd [#allocation5], %s67
      %s70 = sshll.u32 [#allocation6], 4
      %s71 = int_to_ptr.vmem [resolvable:$true] %s70
      %73 = dma.hbm_to_vmem [thread:$0]  %s6, 16, %s71, [#allocation5]
    $region29: #{gen_ac_wgan_gp_1d_forward.1} parent=1 // pred_fallthru
      _
    // Predicated region
    $region30: #{gen_ac_wgan_gp_1d_forward.1} parent=1 // pred_check
      _
    $region31: #{gen_ac_wgan_gp_1d_forward.1} parent=1 // pred_check_branch
      %75 = sbr.rel (0) target = $region33
    $region32: #{gen_ac_wgan_gp_1d_forward.1} parent=1 // pred_region
      _
    $region33: #{gen_ac_wgan_gp_1d_forward.1} parent=1 // pred_fallthru
      _
    // Predicated region
    $region34: #{gen_ac_wgan_gp_1d_forward.1} parent=1 // pred_check
      _
    $region35: #{gen_ac_wgan_gp_1d_forward.1} parent=1 // pred_check_branch
      %77 = sbr.rel (0) target = $region37
    $region36: #{gen_ac_wgan_gp_1d_forward.1} parent=1 // pred_region
      _
    $region37: #{gen_ac_wgan_gp_1d_forward.1} parent=1 // pred_fallthru
      _
    // Predicated region
    $region38: #{gen_ac_wgan_gp_1d_forward.1} parent=1 // pred_check
      _
    $region39: #{gen_ac_wgan_gp_1d_forward.1} parent=1 // pred_check_branch
      %79 = sbr.rel (0) target = $region41
    $region40: #{gen_ac_wgan_gp_1d_forward.1} parent=1 // pred_region
      _
    $region41: #{gen_ac_wgan_gp_1d_forward.1} parent=1 // pred_fallthru
      _
    // Predicated region
    $region42: #{gen_ac_wgan_gp_1d_forward.1} parent=1 // pred_check
      _
    $region43: #{gen_ac_wgan_gp_1d_forward.1} parent=1 // pred_check_branch
      %81 = sbr.rel (0) target = $region45
    $region44: #{gen_ac_wgan_gp_1d_forward.1} parent=1 // pred_region
      %s83 = ssub.s32 16, 16
      %84 = vsyncadd [#allocation8], %s83
      %s86 = sshll.u32 [#allocation7], 4
      %s87 = int_to_ptr.vmem [resolvable:$true] %s86
      %89 = dma.hbm_to_vmem [thread:$0]  %s10, 16, %s87, [#allocation8]
    $region45: #{gen_ac_wgan_gp_1d_forward.1} parent=1 // pred_fallthru
      _
    // Predicated region
    $region46: #{gen_ac_wgan_gp_1d_forward.1} parent=1 // pred_check
      _
    $region47: #{gen_ac_wgan_gp_1d_forward.1} parent=1 // pred_check_branch
      %91 = sbr.rel (0) target = $region49
    $region48: #{gen_ac_wgan_gp_1d_forward.1} parent=1 // pred_region
      %s93 = ssub.s32 16, 16
      %94 = vsyncadd [#allocation8], %s93
      %s96 = sshll.u32 [#allocation9], 4
      %s97 = int_to_ptr.vmem [resolvable:$true] %s96
      %99 = dma.hbm_to_vmem [thread:$0]  %s11, 16, %s97, [#allocation8]
    $region49: #{gen_ac_wgan_gp_1d_forward.1} parent=1 // pred_fallthru
      _
    // Predicated region
    $region50: #{gen_ac_wgan_gp_1d_forward.1} parent=1 // pred_check
      _
    $region51: #{gen_ac_wgan_gp_1d_forward.1} parent=1 // pred_check_branch
      %101 = sbr.rel (0) target = $region53
    $region52: #{gen_ac_wgan_gp_1d_forward.1} parent=1 // pred_region
      _
    $region53: #{gen_ac_wgan_gp_1d_forward.1} parent=1 // pred_fallthru
      _
    // Predicated region
    $region54: #{gen_ac_wgan_gp_1d_forward.1} parent=1 // pred_check
      _
    $region55: #{gen_ac_wgan_gp_1d_forward.1} parent=1 // pred_check_branch
      %103 = sbr.rel (0) target = $region57
    $region56: #{gen_ac_wgan_gp_1d_forward.1} parent=1 // pred_region
      _
    $region57: #{gen_ac_wgan_gp_1d_forward.1} parent=1 // pred_fallthru
      _
    // Predicated region
    $region58: #{gen_ac_wgan_gp_1d_forward.1} parent=1 // pred_check
      _
    $region59: #{gen_ac_wgan_gp_1d_forward.1} parent=1 // pred_check_branch
      %105 = sbr.rel (0) target = $region61
    $region60: #{gen_ac_wgan_gp_1d_forward.1} parent=1 // pred_region
      _
    $region61: #{gen_ac_wgan_gp_1d_forward.1} parent=1 // pred_fallthru
      _
    // Predicated region
    $region62: #{gen_ac_wgan_gp_1d_forward.1} parent=1 // pred_check
      _
    $region63: #{gen_ac_wgan_gp_1d_forward.1} parent=1 // pred_check_branch
      %107 = sbr.rel (0) target = $region65
    $region64: #{gen_ac_wgan_gp_1d_forward.1} parent=1 // pred_region
      %s109 = ssub.s32 16, 16
      %110 = vsyncadd [#allocation11], %s109
      %s112 = sshll.u32 [#allocation10], 4
      %s113 = int_to_ptr.vmem [resolvable:$true] %s112
      %115 = dma.hbm_to_vmem [thread:$0]  %s15, 16, %s113, [#allocation11]
    $region65: #{gen_ac_wgan_gp_1d_forward.1} parent=1 // pred_fallthru
      _
    // Predicated region
    $region66: #{gen_ac_wgan_gp_1d_forward.1} parent=1 // pred_check
      _
    $region67: #{gen_ac_wgan_gp_1d_forward.1} parent=1 // pred_check_branch
      %117 = sbr.rel (0) target = $region69
    $region68: #{gen_ac_wgan_gp_1d_forward.1} parent=1 // pred_region
      %s119 = ssub.s32 16, 16
      %120 = vsyncadd [#allocation11], %s119
      %s122 = sshll.u32 [#allocation12], 4
      %s123 = int_to_ptr.vmem [resolvable:$true] %s122
      %125 = dma.hbm_to_vmem [thread:$0]  %s16, 16, %s123, [#allocation11]
    $region69: #{gen_ac_wgan_gp_1d_forward.1} parent=1 // pred_fallthru
      _
    // Predicated region
    $region70: #{gen_ac_wgan_gp_1d_forward.1} parent=1 // pred_check
      _
    $region71: #{gen_ac_wgan_gp_1d_forward.1} parent=1 // pred_check_branch
      %127 = sbr.rel (0) target = $region73
    $region72: #{gen_ac_wgan_gp_1d_forward.1} parent=1 // pred_region
      %s129 = ssub.s32 4096, 4096
      %130 = vsyncadd [#allocation14], %s129
      %s131 = sshll.u32 [#allocation13], 4
      %s132 = int_to_ptr.vmem [resolvable:$true] %s131
      %137 = dma.hbm_to_vmem [thread:$0]  %s17, 4096, %s132, [#allocation14], 128, 128, 8
    $region73: #{gen_ac_wgan_gp_1d_forward.1} parent=1 // pred_fallthru
      _
    // Predicated region
    $region74: #{gen_ac_wgan_gp_1d_forward.1} parent=1 // pred_check
      _
    $region75: #{gen_ac_wgan_gp_1d_forward.1} parent=1 // pred_check_branch
      %139 = sbr.rel (0) target = $region77
    $region76: #{gen_ac_wgan_gp_1d_forward.1} parent=1 // pred_region
      _
    $region77: #{gen_ac_wgan_gp_1d_forward.1} parent=1 // pred_fallthru
      _
    // Predicated region
    $region78: #{gen_ac_wgan_gp_1d_forward.1} parent=1 // pred_check
      _
    $region79: #{gen_ac_wgan_gp_1d_forward.1} parent=1 // pred_check_branch
      %141 = sbr.rel (0) target = $region81
    $region80: #{gen_ac_wgan_gp_1d_forward.1} parent=1 // pred_region
      _
    $region81: #{gen_ac_wgan_gp_1d_forward.1} parent=1 // pred_fallthru
      _
    // Predicated region
    $region82: #{gen_ac_wgan_gp_1d_forward.1} parent=1 // pred_check
      _
    $region83: #{gen_ac_wgan_gp_1d_forward.1} parent=1 // pred_check_branch
      %143 = sbr.rel (0) target = $region85
    $region84: #{gen_ac_wgan_gp_1d_forward.1} parent=1 // pred_region
      %s145 = ssub.s32 16, 16
      %146 = vsyncadd [#allocation14], %s145
      %s148 = sshll.u32 [#allocation15], 4
      %s149 = int_to_ptr.vmem [resolvable:$true] %s148
      %151 = dma.hbm_to_vmem [thread:$0]  %s20, 16, %s149, [#allocation14]
    $region85: #{gen_ac_wgan_gp_1d_forward.1} parent=1 // pred_fallthru
      _
    // Predicated region
    $region86: #{gen_ac_wgan_gp_1d_forward.1} parent=1 // pred_check
      _
    $region87: #{gen_ac_wgan_gp_1d_forward.1} parent=1 // pred_check_branch
      %153 = sbr.rel (0) target = $region89
    $region88: #{gen_ac_wgan_gp_1d_forward.1} parent=1 // pred_region
      %s155 = ssub.s32 16, 16
      %156 = vsyncadd [#allocation17], %s155
      %s158 = sshll.u32 [#allocation16], 4
      %s159 = int_to_ptr.vmem [resolvable:$true] %s158
      %161 = dma.hbm_to_vmem [thread:$0]  %s21, 16, %s159, [#allocation17]
    $region89: #{gen_ac_wgan_gp_1d_forward.1} parent=1 // pred_fallthru
      _
    // Predicated region
    $region90: #{gen_ac_wgan_gp_1d_forward.1} parent=1 // pred_check
      _
    $region91: #{gen_ac_wgan_gp_1d_forward.1} parent=1 // pred_check_branch
      %163 = sbr.rel (0) target = $region93
    $region92: #{gen_ac_wgan_gp_1d_forward.1} parent=1 // pred_region
      %s165 = ssub.s32 4096, 4096
      %166 = vsyncadd [#allocation17], %s165
      %s167 = sshll.u32 [#allocation18], 4
      %s168 = int_to_ptr.vmem [resolvable:$true] %s167
      %173 = dma.hbm_to_vmem [thread:$0]  %s22, 4096, %s168, [#allocation17], 128, 128, 8
    $region93: #{gen_ac_wgan_gp_1d_forward.1} parent=1 // pred_fallthru
      _
    // Predicated region
    $region94: #{gen_ac_wgan_gp_1d_forward.1} parent=1 // pred_check
      _
    $region95: #{gen_ac_wgan_gp_1d_forward.1} parent=1 // pred_check_branch
      %175 = sbr.rel (0) target = $region97
    $region96: #{gen_ac_wgan_gp_1d_forward.1} parent=1 // pred_region
      %s177 = ssub.s32 32, 32
      %178 = vsyncadd [#allocation20], %s177
      %s180 = sshll.u32 [#allocation19], 4
      %s181 = int_to_ptr.vmem [resolvable:$true] %s180
      %183 = dma.hbm_to_vmem [thread:$0]  %s23, 32, %s181, [#allocation20]
    $region97: #{gen_ac_wgan_gp_1d_forward.1} parent=1 // pred_fallthru
      _
    // Predicated region
    $region98: #{gen_ac_wgan_gp_1d_forward.1} parent=1 // pred_check
      _
    $region99: #{gen_ac_wgan_gp_1d_forward.1} parent=1 // pred_check_branch
      %185 = sbr.rel (0) target = $region101
    $region100: #{gen_ac_wgan_gp_1d_forward.1} parent=1 // pred_region
      %186 = dma.done [#allocation3], 128
    $region101: #{gen_ac_wgan_gp_1d_forward.1} parent=1 // pred_fallthru
      _
    // Predicated region
    $region102: #{gen_ac_wgan_gp_1d_forward.1} parent=1 // pred_check
      _
    $region103: #{gen_ac_wgan_gp_1d_forward.1} parent=1 // pred_check_branch
      %188 = sbr.rel (0) target = $region105
    $region104: #{gen_ac_wgan_gp_1d_forward.1} parent=1 // pred_region
      %189 = dma.done [#allocation5], 16
    $region105: #{gen_ac_wgan_gp_1d_forward.1} parent=1 // pred_fallthru
      _
    // Predicated region
    $region106: #{gen_ac_wgan_gp_1d_forward.1} parent=1 // pred_check
      _
    $region107: #{gen_ac_wgan_gp_1d_forward.1} parent=1 // pred_check_branch
      %191 = sbr.rel (0) target = $region109
    $region108: #{gen_ac_wgan_gp_1d_forward.1} parent=1 // pred_region
      %192 = dma.done [#allocation5], 16
    $region109: #{gen_ac_wgan_gp_1d_forward.1} parent=1 // pred_fallthru
      _
    // Predicated region
    $region110: #{gen_ac_wgan_gp_1d_forward.1} parent=1 // pred_check
      _
    $region111: #{gen_ac_wgan_gp_1d_forward.1} parent=1 // pred_check_branch
      %194 = sbr.rel (0) target = $region113
    $region112: #{gen_ac_wgan_gp_1d_forward.1} parent=1 // pred_region
      %195 = dma.done [#allocation8], 16
    $region113: #{gen_ac_wgan_gp_1d_forward.1} parent=1 // pred_fallthru
      _
    // Predicated region
    $region114: #{gen_ac_wgan_gp_1d_forward.1} parent=1 // pred_check
      _
    $region115: #{gen_ac_wgan_gp_1d_forward.1} parent=1 // pred_check_branch
      %197 = sbr.rel (0) target = $region117
    $region116: #{gen_ac_wgan_gp_1d_forward.1} parent=1 // pred_region
      %198 = dma.done [#allocation8], 16
    $region117: #{gen_ac_wgan_gp_1d_forward.1} parent=1 // pred_fallthru
      _
    // Predicated region
    $region118: #{gen_ac_wgan_gp_1d_forward.1} parent=1 // pred_check
      _
    $region119: #{gen_ac_wgan_gp_1d_forward.1} parent=1 // pred_check_branch
      %200 = sbr.rel (0) target = $region121
    $region120: #{gen_ac_wgan_gp_1d_forward.1} parent=1 // pred_region
      %201 = dma.done [#allocation11], 16
    $region121: #{gen_ac_wgan_gp_1d_forward.1} parent=1 // pred_fallthru
      _
    // Predicated region
    $region122: #{gen_ac_wgan_gp_1d_forward.1} parent=1 // pred_check
      _
    $region123: #{gen_ac_wgan_gp_1d_forward.1} parent=1 // pred_check_branch
      %203 = sbr.rel (0) target = $region125
    $region124: #{gen_ac_wgan_gp_1d_forward.1} parent=1 // pred_region
      %204 = dma.done [#allocation11], 16
    $region125: #{gen_ac_wgan_gp_1d_forward.1} parent=1 // pred_fallthru
      _
    // Predicated region
    $region126: #{gen_ac_wgan_gp_1d_forward.1} parent=1 // pred_check
      _
    $region127: #{gen_ac_wgan_gp_1d_forward.1} parent=1 // pred_check_branch
      %206 = sbr.rel (0) target = $region129
    $region128: #{gen_ac_wgan_gp_1d_forward.1} parent=1 // pred_region
      %207 = dma.done [#allocation14], 4096
    $region129: #{gen_ac_wgan_gp_1d_forward.1} parent=1 // pred_fallthru
      _
    // Predicated region
    $region130: #{gen_ac_wgan_gp_1d_forward.1} parent=1 // pred_check
      _
    $region131: #{gen_ac_wgan_gp_1d_forward.1} parent=1 // pred_check_branch
      %209 = sbr.rel (0) target = $region133
    $region132: #{gen_ac_wgan_gp_1d_forward.1} parent=1 // pred_region
      %210 = dma.done [#allocation14], 16
    $region133: #{gen_ac_wgan_gp_1d_forward.1} parent=1 // pred_fallthru
      _
    // Predicated region
    $region134: #{gen_ac_wgan_gp_1d_forward.1} parent=1 // pred_check
      _
    $region135: #{gen_ac_wgan_gp_1d_forward.1} parent=1 // pred_check_branch
      %212 = sbr.rel (0) target = $region137
    $region136: #{gen_ac_wgan_gp_1d_forward.1} parent=1 // pred_region
      %213 = dma.done [#allocation17], 16
    $region137: #{gen_ac_wgan_gp_1d_forward.1} parent=1 // pred_fallthru
      _
    // Predicated region
    $region138: #{gen_ac_wgan_gp_1d_forward.1} parent=1 // pred_check
      _
    $region139: #{gen_ac_wgan_gp_1d_forward.1} parent=1 // pred_check_branch
      %215 = sbr.rel (0) target = $region141
    $region140: #{gen_ac_wgan_gp_1d_forward.1} parent=1 // pred_region
      %216 = dma.done [#allocation17], 4096
    $region141: #{gen_ac_wgan_gp_1d_forward.1} parent=1 // pred_fallthru
      _
    // Predicated region
    $region142: #{gen_ac_wgan_gp_1d_forward.1} parent=1 // pred_check
      _
    $region143: #{gen_ac_wgan_gp_1d_forward.1} parent=1 // pred_check_branch
      %218 = sbr.rel (0) target = $region145
    $region144: #{gen_ac_wgan_gp_1d_forward.1} parent=1 // pred_region
      %219 = dma.done [#allocation20], 32
    $region145: #{gen_ac_wgan_gp_1d_forward.1} parent=1 // pred_fallthru
      _
    %v221 = vld [vmem:[%s1] sm:$0xff]
    %v222 = vld [vmem:[%s1 + $0x8] sm:$0xff]
    %v223 = vlaneseq
    %v224 = vshrl.u32 %v223, 7
    %vm225 = vcmp.eq.s32.totalorder %v224, 0
    %v226 = vsel %vm225, 1, 0
    %v227 = vcvt.s32.f32 %v226
    %v228 = vsub.f32 1.0, %v227
    %v229 = vld [vmem:[%s0] sm:$0xff]
    %v230 = vld [vmem:[%s0 + $0x8] sm:$0xff]
    %v231 = vpack.c.bf16 %v230, %v229
    %v232 = vld [vmem:[#allocation2] sm:$0xff]
    %v234 = vunpack.c.l.b16 %v232
    %v235 = vunpack.c.h.b16 %v232
    %v236 = vpack.c.b16 %v234, %v234
    %v237 = vpack.c.b16 %v235, %v235
    %vm238 = vcmask 64512
    %v240 = vsel %vm238, %v231, 0
    %vm242 = vcmask 1043456
    %v244 = vsel %vm242, %v236, 0
    %v247 = vsel %vm242, %v237, 0
    %249 = vmatprep.subr.bf16.mxu0 0
    %250 = vmatpush1.bf16.msra.mxu0 0
    %251 = vmatprep.subr.bf16.mxu0 0
    %252 = vmatpush1.bf16.msra.mxu0 0
    %253 = vmatprep.subr.bf16.mxu0 0
    %254 = vmatpush1.bf16.msra.mxu0 0
    %255 = vmatprep.subr.bf16.mxu0 0
    %256 = vmatpush1.bf16.msra.mxu0 0
    %257 = vmatprep.subr.bf16.mxu0 0
    %258 = vmatpush1.bf16.msra.mxu0 0
    %259 = vmatprep.subr.bf16.mxu0 0
    %260 = vmatpush1.bf16.msra.mxu0 0
    %261 = vmatprep.subr.bf16.mxu0 0
    %262 = vmatpush1.bf16.msra.mxu0 0
    %263 = vmatprep.subr.bf16.mxu0 %v247
    %264 = vmatpush1.bf16.msra.mxu0 %v244
    %265 = vmatprep.subr.bf16.mxu0 0
    %266 = vmatpush2.bf16.msra.mxu0 0
    %267 = vmatprep.subr.bf16.mxu0 0
    %268 = vmatpush2.bf16.msra.mxu0 0
    %269 = vmatprep.subr.bf16.mxu0 0
    %270 = vmatpush2.bf16.msra.mxu0 0
    %271 = vmatprep.subr.bf16.mxu0 0
    %272 = vmatpush2.bf16.msra.mxu0 0
    %273 = vmatprep.subr.bf16.mxu0 0
    %274 = vmatpush2.bf16.msra.mxu0 0
    %275 = vmatprep.subr.bf16.mxu0 0
    %276 = vmatpush2.bf16.msra.mxu0 0
    %277 = vmatprep.subr.bf16.mxu0 0
    %278 = vmatpush2.bf16.msra.mxu0 0
    %279 = vmatprep.subr.bf16.mxu0 0
    %280 = vmatpush2.bf16.msra.mxu0 0
    %281 = vmatprep.mubr.bf16.mxu0 0
    %282 = vmatmul.mubr.bf16.gmra.mxu0 %v240
    %v283 = vpop.f32.mrf.mxu0
    %v284 = vadd.f32 0.0, %v283
    %v285 = vpop.f32.mrf.mxu0
    %v286 = vadd.f32 0.0, %v285
    %v287 = vpop.f32.mrf.mxu0
    %v288 = vadd.f32 0.0, %v287
    %v289 = vpop.f32.mrf.mxu0
    %v290 = vadd.f32 0.0, %v289
    %291 = vdwg.mxu0
    %v292 = vld [vmem:[%s3] sm:$0xf]
    %v293 = vld [vmem:[%s3 + $0x4] sm:$0xf]
    %v294 = vld [vmem:[%s3 + $0x8] sm:$0xf]
    %v295 = vld [vmem:[%s3 + $0xc] sm:$0xf]
    %v296 = vld [vmem:[%s3 + $0x10] sm:$0xf]
    %v297 = vld [vmem:[%s3 + $0x14] sm:$0xf]
    %v298 = vld [vmem:[%s3 + $0x18] sm:$0xf]
    %v299 = vld [vmem:[%s3 + $0x1c] sm:$0xf]
    %v300 = vld [vmem:[%s3 + $0x20] sm:$0xf]
    %v301 = vld [vmem:[%s3 + $0x24] sm:$0xf]
    %v302 = vld [vmem:[%s3 + $0x28] sm:$0xf]
    %v303 = vld [vmem:[%s3 + $0x2c] sm:$0xf]
    %v304 = vld [vmem:[%s3 + $0x30] sm:$0xf]
    %v305 = vld [vmem:[%s3 + $0x34] sm:$0xf]
    %v306 = vld [vmem:[%s3 + $0x38] sm:$0xf]
    %v307 = vld [vmem:[%s3 + $0x3c] sm:$0xf]
    %v308 = vld [vmem:[%s3 + $0x40] sm:$0xf]
    %v309 = vld [vmem:[%s3 + $0x44] sm:$0xf]
    %v310 = vld [vmem:[%s3 + $0x48] sm:$0xf]
    %v311 = vld [vmem:[%s3 + $0x4c] sm:$0xf]
    %v312 = vld [vmem:[%s3 + $0x50] sm:$0xf]
    %v313 = vld [vmem:[%s3 + $0x54] sm:$0xf]
    %v314 = vld [vmem:[%s3 + $0x58] sm:$0xf]
    %v315 = vld [vmem:[%s3 + $0x5c] sm:$0xf]
    %v316 = vld [vmem:[%s3 + $0x60] sm:$0xf]
    %v317 = vld [vmem:[%s3 + $0x64] sm:$0xf]
    %v318 = vld [vmem:[%s3 + $0x68] sm:$0xf]
    %v319 = vld [vmem:[%s3 + $0x6c] sm:$0xf]
    %v320 = vld [vmem:[%s3 + $0x70] sm:$0xf]
    %v321 = vld [vmem:[%s3 + $0x74] sm:$0xf]
    %v322 = vld [vmem:[%s3 + $0x78] sm:$0xf]
    %v323 = vld [vmem:[%s3 + $0x7c] sm:$0xf]
    %v324 = vld [vmem:[%s4] sm:$0xff]
    %v325 = vld [vmem:[%s4 + $0x8] sm:$0xff]
    %v326 = vld [vmem:[%s4 + $0x10] sm:$0xff]
    %v327 = vld [vmem:[%s4 + $0x18] sm:$0xff]
    %v328 = vld [vmem:[%s4 + $0x20] sm:$0xff]
    %v329 = vld [vmem:[%s4 + $0x28] sm:$0xff]
    %v330 = vld [vmem:[%s4 + $0x30] sm:$0xff]
    %v331 = vld [vmem:[%s4 + $0x38] sm:$0xff]
    %v332 = vld [vmem:[#allocation4] sm:$0x1]
    %v333 = vld [vmem:[#allocation6] sm:$0x1]
    %v334 = vadd.f32 %v284, %v288
    %v335 = vrot.slane %v334, 4
    %v336 = vadd.f32 %v334, %v335
    %v337 = vrot.slane %v336, 2
    %v338 = vadd.f32 %v336, %v337
    %v339 = vrot.slane %v338, 1
    %v340 = vadd.f32 %v338, %v339
    %v341 = vadd.f32 %v286, %v290
    %v342 = vrot.slane %v341, 4
    %v343 = vadd.f32 %v341, %v342
    %v344 = vrot.slane %v343, 2
    %v345 = vadd.f32 %v343, %v344
    %v346 = vrot.slane %v345, 1
    %v347 = vadd.f32 %v345, %v346
    %v348 = vmul.f32 %v284, %v284
    %v349 = vmul.f32 %v286, %v286
    %v350 = vmul.f32 %v288, %v288
    %v351 = vmul.f32 %v290, %v290
    %v352 = vadd.f32 %v348, %v350
    %v353 = vrot.slane %v352, 4
    %v354 = vadd.f32 %v352, %v353
    %v355 = vrot.slane %v354, 2
    %v356 = vadd.f32 %v354, %v355
    %v357 = vrot.slane %v356, 1
    %v358 = vadd.f32 %v356, %v357
    %v359 = vadd.f32 %v349, %v351
    %v360 = vrot.slane %v359, 4
    %v361 = vadd.f32 %v359, %v360
    %v362 = vrot.slane %v361, 2
    %v363 = vadd.f32 %v361, %v362
    %v364 = vrot.slane %v363, 1
    %v365 = vadd.f32 %v363, %v364
    %v366 = vmul.f32 %v227, %v340
    %v367 = vmul.f32 %v227, %v347
    %v368 = vmul.f32 %v228, %v358
    %v369 = vmul.f32 %v228, %v365
    %v370 = vadd.f32 %v366, %v368
    %v371 = vadd.f32 %v367, %v369
    %v372 = vunpack.c.l.bf16 %v292
    %v373 = vunpack.c.l.bf16 %v293
    %v374 = vunpack.c.l.bf16 %v294
    %v375 = vunpack.c.l.bf16 %v295
    %v376 = vunpack.c.l.bf16 %v296
    %v377 = vunpack.c.l.bf16 %v297
    %v378 = vunpack.c.l.bf16 %v298
    %v379 = vunpack.c.l.bf16 %v299
    %v380 = vunpack.c.l.bf16 %v300
    %v381 = vunpack.c.l.bf16 %v301
    %v382 = vunpack.c.l.bf16 %v302
    %v383 = vunpack.c.l.bf16 %v303
    %v384 = vunpack.c.l.bf16 %v304
    %v385 = vunpack.c.l.bf16 %v305
    %v386 = vunpack.c.l.bf16 %v306
    %v387 = vunpack.c.l.bf16 %v307
    %v388 = vunpack.c.l.bf16 %v308
    %v389 = vunpack.c.l.bf16 %v309
    %v390 = vunpack.c.l.bf16 %v310
    %v391 = vunpack.c.l.bf16 %v311
    %v392 = vunpack.c.l.bf16 %v312
    %v393 = vunpack.c.l.bf16 %v313
    %v394 = vunpack.c.l.bf16 %v314
    %v395 = vunpack.c.l.bf16 %v315
    %v396 = vunpack.c.l.bf16 %v316
    %v397 = vunpack.c.l.bf16 %v317
    %v398 = vunpack.c.l.bf16 %v318
    %v399 = vunpack.c.l.bf16 %v319
    %v400 = vunpack.c.l.bf16 %v320
    %v401 = vunpack.c.l.bf16 %v321
    %v402 = vunpack.c.l.bf16 %v322
    %v403 = vunpack.c.l.bf16 %v323
    %404 = vmatprep.subr.mxu0 0.0
    %405 = vmatpush1.msra.mxu0 %v387
    %406 = vmatprep.subr.mxu0 0.0
    %407 = vmatpush1.msra.mxu0 %v386
    %408 = vmatprep.subr.mxu0 0.0
    %409 = vmatpush1.msra.mxu0 %v385
    %410 = vmatprep.subr.mxu0 0.0
    %411 = vmatpush1.msra.mxu0 %v384
    %412 = vmatprep.subr.mxu0 0.0
    %413 = vmatpush1.msra.mxu0 %v383
    %414 = vmatprep.subr.mxu0 0.0
    %415 = vmatpush1.msra.mxu0 %v382
    %416 = vmatprep.subr.mxu0 0.0
    %417 = vmatpush1.msra.mxu0 %v381
    %418 = vmatprep.subr.mxu0 0.0
    %419 = vmatpush1.msra.mxu0 %v380
    %420 = vmatprep.subr.mxu0 0.0
    %421 = vmatpush1.msra.mxu0 %v379
    %422 = vmatprep.subr.mxu0 0.0
    %423 = vmatpush1.msra.mxu0 %v378
    %424 = vmatprep.subr.mxu0 0.0
    %425 = vmatpush1.msra.mxu0 %v377
    %426 = vmatprep.subr.mxu0 0.0
    %427 = vmatpush1.msra.mxu0 %v376
    %428 = vmatprep.subr.mxu0 0.0
    %429 = vmatpush1.msra.mxu0 %v375
    %430 = vmatprep.subr.mxu0 0.0
    %431 = vmatpush1.msra.mxu0 %v374
    %432 = vmatprep.subr.mxu0 0.0
    %433 = vmatpush1.msra.mxu0 %v373
    %434 = vmatprep.subr.mxu0 0.0
    %435 = vmatpush1.msra.mxu0 %v372
    %436 = vmatprep.subr.mxu0 0.0
    %437 = vmatpush2.msra.mxu0 %v403
    %438 = vmatprep.subr.mxu0 0.0
    %439 = vmatpush2.msra.mxu0 %v402
    %440 = vmatprep.subr.mxu0 0.0
    %441 = vmatpush2.msra.mxu0 %v401
    %442 = vmatprep.subr.mxu0 0.0
    %443 = vmatpush2.msra.mxu0 %v400
    %444 = vmatprep.subr.mxu0 0.0
    %445 = vmatpush2.msra.mxu0 %v399
    %446 = vmatprep.subr.mxu0 0.0
    %447 = vmatpush2.msra.mxu0 %v398
    %448 = vmatprep.subr.mxu0 0.0
    %449 = vmatpush2.msra.mxu0 %v397
    %450 = vmatprep.subr.mxu0 0.0
    %451 = vmatpush2.msra.mxu0 %v396
    %452 = vmatprep.subr.mxu0 0.0
    %453 = vmatpush2.msra.mxu0 %v395
    %454 = vmatprep.subr.mxu0 0.0
    %455 = vmatpush2.msra.mxu0 %v394
    %456 = vmatprep.subr.mxu0 0.0
    %457 = vmatpush2.msra.mxu0 %v393
    %458 = vmatprep.subr.mxu0 0.0
    %459 = vmatpush2.msra.mxu0 %v392
    %460 = vmatprep.subr.mxu0 0.0
    %461 = vmatpush2.msra.mxu0 %v391
    %462 = vmatprep.subr.mxu0 0.0
    %463 = vmatpush2.msra.mxu0 %v390
    %464 = vmatprep.subr.mxu0 0.0
    %465 = vmatpush2.msra.mxu0 %v389
    %466 = vmatprep.subr.mxu0 0.0
    %467 = vmatpush2.msra.mxu0 %v388
    %468 = vmatprep.mubr.f32.mxu0 %v371
    %469 = vmatmul.mubr.f32.gmra.mxu0 %v370
    %v470 = vpop.f32.mrf.mxu0
    %v471 = vadd.f32 0.0, %v470
    %v472 = vpop.f32.mrf.mxu0
    %473 = vdwg.mxu0
    %v474 = vrcp.pop 8.0
    %v475 = vmul.f32 %v471, %v474
    %v476 = vmul.f32 %v475, %v475
    %v478 = vrot.slane %v476, 7
    %v480 = vsub.f32 %v475, %v478
    %v481 = vmax.f32 %v480, 0.0
    %v482 = vadd.f32 %v481, 1e-05
    %v483 = vrsqrt.pop %v482
    %v486 = vunpack.c.l.s4 1966171168
    %v487 = vunpack.c.0.s8 %v486
    %v488 = vlaneseq
    %v489 = vshrl.u32 %v488, 7
    %v490 = vsub.s32 %v487, %v489
    %v491 = vrot.slane %v483, %v490
    %v492 = vcombine.high %v491, %v491
    %v494 = vunpack.c.l.s4 1966171168
    %v495 = vunpack.c.0.s8 %v494
    %v496 = vlaneseq
    %v497 = vshrl.u32 %v496, 7
    %v498 = vsub.s32 %v495, %v497
    %v499 = vrot.slane %v492, %v498
    %v501 = vmul.f32 %v332, %v499
    %v502 = vmul.f32 %v475, %v501
    %v503 = vsub.f32 %v333, %v502
    %v505 = vlaneseq
    %v506 = vshrl.u32 %v505, 7
    %v507 = vsub.s32 0, %v506
    %v508 = vrot.slane %v501, %v507
    %v510 = vmul.f32 %v227, %v508
    %v512 = vlaneseq
    %v513 = vshrl.u32 %v512, 7
    %v514 = vsub.s32 0, %v513
    %v515 = vrot.slane %v503, %v514
    %v517 = vmul.f32 %v228, %v515
    %v518 = vadd.f32 %v510, %v517
    %v519 = vunpack.c.l.bf16 %v324
    %v520 = vunpack.c.h.bf16 %v324
    %v521 = vunpack.c.l.bf16 %v325
    %v522 = vunpack.c.h.bf16 %v325
    %v523 = vunpack.c.l.bf16 %v326
    %v524 = vunpack.c.h.bf16 %v326
    %v525 = vunpack.c.l.bf16 %v327
    %v526 = vunpack.c.h.bf16 %v327
    %v527 = vunpack.c.l.bf16 %v328
    %v528 = vunpack.c.h.bf16 %v328
    %v529 = vunpack.c.l.bf16 %v329
    %v530 = vunpack.c.h.bf16 %v329
    %v531 = vunpack.c.l.bf16 %v330
    %v532 = vunpack.c.h.bf16 %v330
    %v533 = vunpack.c.l.bf16 %v331
    %v534 = vunpack.c.h.bf16 %v331
    %vm535 = vcmask 523264
    %v537 = vsel %vm535, %v518, 0
    %539 = vmatprep.subr.mxu0 0.0
    %540 = vmatpush1.msra.mxu0 0.0
    %541 = vmatprep.subr.mxu0 0.0
    %542 = vmatpush1.msra.mxu0 0.0
    %543 = vmatprep.subr.mxu0 0.0
    %544 = vmatpush1.msra.mxu0 0.0
    %545 = vmatprep.subr.mxu0 0.0
    %546 = vmatpush1.msra.mxu0 0.0
    %547 = vmatprep.subr.mxu0 0.0
    %548 = vmatpush1.msra.mxu0 0.0
    %549 = vmatprep.subr.mxu0 0.0
    %550 = vmatpush1.msra.mxu0 0.0
    %551 = vmatprep.subr.mxu0 0.0
    %552 = vmatpush1.msra.mxu0 0.0
    %553 = vmatprep.subr.mxu0 0.0
    %554 = vmatpush1.msra.mxu0 0.0
    %555 = vmatprep.subr.mxu0 %v534
    %556 = vmatpush1.msra.mxu0 %v533
    %557 = vmatprep.subr.mxu0 %v532
    %558 = vmatpush1.msra.mxu0 %v531
    %559 = vmatprep.subr.mxu0 %v530
    %560 = vmatpush1.msra.mxu0 %v529
    %561 = vmatprep.subr.mxu0 %v528
    %562 = vmatpush1.msra.mxu0 %v527
    %563 = vmatprep.subr.mxu0 %v526
    %564 = vmatpush1.msra.mxu0 %v525
    %565 = vmatprep.subr.mxu0 %v524
    %566 = vmatpush1.msra.mxu0 %v523
    %567 = vmatprep.subr.mxu0 %v522
    %568 = vmatpush1.msra.mxu0 %v521
    %569 = vmatprep.subr.mxu0 %v520
    %570 = vmatpush1.msra.mxu0 %v519
    %571 = vmatprep.subr.mxu0 0.0
    %572 = vmatpush2.msra.mxu0 0.0
    %573 = vmatprep.subr.mxu0 0.0
    %574 = vmatpush2.msra.mxu0 0.0
    %575 = vmatprep.subr.mxu0 0.0
    %576 = vmatpush2.msra.mxu0 0.0
    %577 = vmatprep.subr.mxu0 0.0
    %578 = vmatpush2.msra.mxu0 0.0
    %579 = vmatprep.subr.mxu0 0.0
    %580 = vmatpush2.msra.mxu0 0.0
    %581 = vmatprep.subr.mxu0 0.0
    %582 = vmatpush2.msra.mxu0 0.0
    %583 = vmatprep.subr.mxu0 0.0
    %584 = vmatpush2.msra.mxu0 0.0
    %585 = vmatprep.subr.mxu0 0.0
    %586 = vmatpush2.msra.mxu0 0.0
    %587 = vmatprep.subr.mxu0 0.0
    %588 = vmatpush2.msra.mxu0 0.0
    %589 = vmatprep.subr.mxu0 0.0
    %590 = vmatpush2.msra.mxu0 0.0
    %591 = vmatprep.subr.mxu0 0.0
    %592 = vmatpush2.msra.mxu0 0.0
    %593 = vmatprep.subr.mxu0 0.0
    %594 = vmatpush2.msra.mxu0 0.0
    %595 = vmatprep.subr.mxu0 0.0
    %596 = vmatpush2.msra.mxu0 0.0
    %597 = vmatprep.subr.mxu0 0.0
    %598 = vmatpush2.msra.mxu0 0.0
    %599 = vmatprep.subr.mxu0 0.0
    %600 = vmatpush2.msra.mxu0 0.0
    %601 = vmatprep.subr.mxu0 0.0
    %602 = vmatpush2.msra.mxu0 0.0
    %603 = vmatprep.mubr.f32.mxu0 0.0
    %604 = vmatmul.mubr.f32.gmra.mxu0 %v537
    %v605 = vpop.f32.mrf.mxu0
    %v606 = vadd.f32 0.0, %v605
    %v607 = vpop.f32.mrf.mxu0
    %v608 = vadd.f32 0.0, %v607
    %609 = vdwg.mxu0
    %v610 = vlaneseq
    %v611 = vshrl.u32 %v610, 7
    %v612 = vsub.s32 0, %v611
    %v613 = vrot.slane %v606, %v612
    %v614 = vlaneseq
    %v615 = vshrl.u32 %v614, 7
    %v616 = vsub.s32 0, %v615
    %v617 = vrot.slane %v608, %v616
    %v618 = vmul.f32 %v284, %v613
    %v619 = vmul.f32 %v286, %v617
    %v620 = vmul.f32 %v288, %v613
    %v621 = vmul.f32 %v290, %v617
    %v622 = vlaneseq
    %v623 = vshrl.u32 %v622, 7
    %v624 = vsub.s32 1, %v623
    %v625 = vrot.slane %v606, %v624
    %v626 = vlaneseq
    %v627 = vshrl.u32 %v626, 7
    %v628 = vsub.s32 1, %v627
    %v629 = vrot.slane %v608, %v628
    %v630 = vadd.f32 %v618, %v625
    %v631 = vadd.f32 %v619, %v629
    %v632 = vadd.f32 %v620, %v625
    %v633 = vadd.f32 %v621, %v629
    %v634 = vmax.f32 %v630, 0.0
    %v635 = vmax.f32 %v631, 0.0
    %v636 = vmax.f32 %v632, 0.0
    %v637 = vmax.f32 %v633, 0.0
    %639 = vset.pattern.permute.xlu0 0
    %640 = vperm.xlu0 %639, %v221
    %v641 = vpop.permute.xlu0 %640
    %644 = vset.pattern.permute.xlu0 0
    %645 = vperm.xlu0 %644, %v222
    %v646 = vpop.permute.xlu0 %645
    %v648 = vmul.f32 %v634, %v641
    %v649 = vmul.f32 %v635, %v641
    %v650 = vmul.f32 %v636, %v646
    %v651 = vmul.f32 %v637, %v646
    %v652 = vpack.c.bf16 %v650, %v648
    %v653 = vpack.c.bf16 %v651, %v649
    %v654 = vld [vmem:[%s7] sm:$0xff]
    %v655 = vld [vmem:[%s7 + $0x8] sm:$0xff]
    %v656 = vld [vmem:[%s7 + $0x10] sm:$0xff]
    %v657 = vld [vmem:[%s7 + $0x18] sm:$0xff]
    %v658 = vld [vmem:[%s7 + $0x20] sm:$0xff]
    %v659 = vld [vmem:[%s7 + $0x28] sm:$0xff]
    %v660 = vld [vmem:[%s7 + $0x30] sm:$0xff]
    %v661 = vld [vmem:[%s7 + $0x38] sm:$0xff]
    %v662 = vld [vmem:[%s7 + $0x40] sm:$0xff]
    %v663 = vld [vmem:[%s7 + $0x48] sm:$0xff]
    %v664 = vld [vmem:[%s7 + $0x50] sm:$0xff]
    %v665 = vld [vmem:[%s7 + $0x58] sm:$0xff]
    %v666 = vld [vmem:[%s7 + $0x60] sm:$0xff]
    %v667 = vld [vmem:[%s7 + $0x68] sm:$0xff]
    %v668 = vld [vmem:[%s7 + $0x70] sm:$0xff]
    %v669 = vld [vmem:[%s7 + $0x78] sm:$0xff]
    %v670 = vld [vmem:[%s7 + $0x80] sm:$0xff]
    %v671 = vld [vmem:[%s7 + $0x88] sm:$0xff]
    %v672 = vld [vmem:[%s7 + $0x90] sm:$0xff]
    %v673 = vld [vmem:[%s7 + $0x98] sm:$0xff]
    %v674 = vld [vmem:[%s7 + $0xa0] sm:$0xff]
    %v675 = vld [vmem:[%s7 + $0xa8] sm:$0xff]
    %v676 = vld [vmem:[%s7 + $0xb0] sm:$0xff]
    %v677 = vld [vmem:[%s7 + $0xb8] sm:$0xff]
    %v678 = vld [vmem:[%s7 + $0xc0] sm:$0xff]
    %v679 = vld [vmem:[%s7 + $0xc8] sm:$0xff]
    %v680 = vld [vmem:[%s7 + $0xd0] sm:$0xff]
    %v681 = vld [vmem:[%s7 + $0xd8] sm:$0xff]
    %v682 = vld [vmem:[%s7 + $0xe0] sm:$0xff]
    %v683 = vld [vmem:[%s7 + $0xe8] sm:$0xff]
    %v684 = vld [vmem:[%s7 + $0xf0] sm:$0xff]
    %v685 = vld [vmem:[%s7 + $0xf8] sm:$0xff]
    %v718 = vunpack.c.l.b16 %v654
    %v719 = vunpack.c.h.b16 %v654
    %v720 = vunpack.c.l.b16 %v655
    %v721 = vunpack.c.h.b16 %v655
    %v722 = vunpack.c.l.b16 %v656
    %v723 = vunpack.c.h.b16 %v656
    %v724 = vunpack.c.l.b16 %v657
    %v725 = vunpack.c.h.b16 %v657
    %v726 = vunpack.c.l.b16 %v658
    %v727 = vunpack.c.h.b16 %v658
    %v728 = vunpack.c.l.b16 %v659
    %v729 = vunpack.c.h.b16 %v659
    %v730 = vunpack.c.l.b16 %v660
    %v731 = vunpack.c.h.b16 %v660
    %v732 = vunpack.c.l.b16 %v661
    %v733 = vunpack.c.h.b16 %v661
    %v734 = vunpack.c.l.b16 %v662
    %v735 = vunpack.c.h.b16 %v662
    %v736 = vunpack.c.l.b16 %v663
    %v737 = vunpack.c.h.b16 %v663
    %v738 = vunpack.c.l.b16 %v664
    %v739 = vunpack.c.h.b16 %v664
    %v740 = vunpack.c.l.b16 %v665
    %v741 = vunpack.c.h.b16 %v665
    %v742 = vunpack.c.l.b16 %v666
    %v743 = vunpack.c.h.b16 %v666
    %v744 = vunpack.c.l.b16 %v667
    %v745 = vunpack.c.h.b16 %v667
    %v746 = vunpack.c.l.b16 %v668
    %v747 = vunpack.c.h.b16 %v668
    %v748 = vunpack.c.l.b16 %v669
    %v749 = vunpack.c.h.b16 %v669
    %v750 = vunpack.c.l.b16 %v670
    %v751 = vunpack.c.h.b16 %v670
    %v752 = vunpack.c.l.b16 %v671
    %v753 = vunpack.c.h.b16 %v671
    %v754 = vunpack.c.l.b16 %v672
    %v755 = vunpack.c.h.b16 %v672
    %v756 = vunpack.c.l.b16 %v673
    %v757 = vunpack.c.h.b16 %v673
    %v758 = vunpack.c.l.b16 %v674
    %v759 = vunpack.c.h.b16 %v674
    %v760 = vunpack.c.l.b16 %v675
    %v761 = vunpack.c.h.b16 %v675
    %v762 = vunpack.c.l.b16 %v676
    %v763 = vunpack.c.h.b16 %v676
    %v764 = vunpack.c.l.b16 %v677
    %v765 = vunpack.c.h.b16 %v677
    %v766 = vunpack.c.l.b16 %v678
    %v767 = vunpack.c.h.b16 %v678
    %v768 = vunpack.c.l.b16 %v679
    %v769 = vunpack.c.h.b16 %v679
    %v770 = vunpack.c.l.b16 %v680
    %v771 = vunpack.c.h.b16 %v680
    %v772 = vunpack.c.l.b16 %v681
    %v773 = vunpack.c.h.b16 %v681
    %v774 = vunpack.c.l.b16 %v682
    %v775 = vunpack.c.h.b16 %v682
    %v776 = vunpack.c.l.b16 %v683
    %v777 = vunpack.c.h.b16 %v683
    %v778 = vunpack.c.l.b16 %v684
    %v779 = vunpack.c.h.b16 %v684
    %v780 = vunpack.c.l.b16 %v685
    %v781 = vunpack.c.h.b16 %v685
    %v782 = vpack.c.b16 %v720, %v718
    %v783 = vpack.c.b16 %v721, %v719
    %v784 = vpack.c.b16 %v724, %v722
    %v785 = vpack.c.b16 %v725, %v723
    %v786 = vpack.c.b16 %v728, %v726
    %v787 = vpack.c.b16 %v729, %v727
    %v788 = vpack.c.b16 %v732, %v730
    %v789 = vpack.c.b16 %v733, %v731
    %v790 = vpack.c.b16 %v736, %v734
    %v791 = vpack.c.b16 %v737, %v735
    %v792 = vpack.c.b16 %v740, %v738
    %v793 = vpack.c.b16 %v741, %v739
    %v794 = vpack.c.b16 %v744, %v742
    %v795 = vpack.c.b16 %v745, %v743
    %v796 = vpack.c.b16 %v748, %v746
    %v797 = vpack.c.b16 %v749, %v747
    %v798 = vpack.c.b16 %v752, %v750
    %v799 = vpack.c.b16 %v753, %v751
    %v800 = vpack.c.b16 %v756, %v754
    %v801 = vpack.c.b16 %v757, %v755
    %v802 = vpack.c.b16 %v760, %v758
    %v803 = vpack.c.b16 %v761, %v759
    %v804 = vpack.c.b16 %v764, %v762
    %v805 = vpack.c.b16 %v765, %v763
    %v806 = vpack.c.b16 %v768, %v766
    %v807 = vpack.c.b16 %v769, %v767
    %v808 = vpack.c.b16 %v772, %v770
    %v809 = vpack.c.b16 %v773, %v771
    %v810 = vpack.c.b16 %v776, %v774
    %v811 = vpack.c.b16 %v777, %v775
    %v812 = vpack.c.b16 %v780, %v778
    %v813 = vpack.c.b16 %v781, %v779
    %846 = vmatprep.subr.bf16.mxu0 %v797
    %847 = vmatpush1.bf16.msra.mxu0 %v796
    %848 = vmatprep.subr.bf16.mxu0 %v795
    %849 = vmatpush1.bf16.msra.mxu0 %v794
    %850 = vmatprep.subr.bf16.mxu0 %v793
    %851 = vmatpush1.bf16.msra.mxu0 %v792
    %852 = vmatprep.subr.bf16.mxu0 %v791
    %853 = vmatpush1.bf16.msra.mxu0 %v790
    %854 = vmatprep.subr.bf16.mxu0 %v789
    %855 = vmatpush1.bf16.msra.mxu0 %v788
    %856 = vmatprep.subr.bf16.mxu0 %v787
    %857 = vmatpush1.bf16.msra.mxu0 %v786
    %858 = vmatprep.subr.bf16.mxu0 %v785
    %859 = vmatpush1.bf16.msra.mxu0 %v784
    %860 = vmatprep.subr.bf16.mxu0 %v783
    %861 = vmatpush1.bf16.msra.mxu0 %v782
    %862 = vmatprep.subr.bf16.mxu0 %v813
    %863 = vmatpush2.bf16.msra.mxu0 %v812
    %864 = vmatprep.subr.bf16.mxu0 %v811
    %865 = vmatpush2.bf16.msra.mxu0 %v810
    %866 = vmatprep.subr.bf16.mxu0 %v809
    %867 = vmatpush2.bf16.msra.mxu0 %v808
    %868 = vmatprep.subr.bf16.mxu0 %v807
    %869 = vmatpush2.bf16.msra.mxu0 %v806
    %870 = vmatprep.subr.bf16.mxu0 %v805
    %871 = vmatpush2.bf16.msra.mxu0 %v804
    %872 = vmatprep.subr.bf16.mxu0 %v803
    %873 = vmatpush2.bf16.msra.mxu0 %v802
    %874 = vmatprep.subr.bf16.mxu0 %v801
    %875 = vmatpush2.bf16.msra.mxu0 %v800
    %876 = vmatprep.subr.bf16.mxu0 %v799
    %877 = vmatpush2.bf16.msra.mxu0 %v798
    %878 = vmatprep.mubr.bf16.mxu0 %v653
    %879 = vmatmul.mubr.bf16.gmra.mxu0 %v652
    %v880 = vpop.f32.mrf.mxu0
    %v881 = vadd.f32 0.0, %v880
    %v882 = vpop.f32.mrf.mxu0
    %v883 = vadd.f32 0.0, %v882
    %v884 = vpop.f32.mrf.mxu0
    %v885 = vadd.f32 0.0, %v884
    %v886 = vpop.f32.mrf.mxu0
    %v887 = vadd.f32 0.0, %v886
    %888 = vdwg.mxu0
    %v889 = vld [vmem:[%s8] sm:$0xf]
    %v890 = vld [vmem:[%s8 + $0x4] sm:$0xf]
    %v891 = vld [vmem:[%s8 + $0x8] sm:$0xf]
    %v892 = vld [vmem:[%s8 + $0xc] sm:$0xf]
    %v893 = vld [vmem:[%s8 + $0x10] sm:$0xf]
    %v894 = vld [vmem:[%s8 + $0x14] sm:$0xf]
    %v895 = vld [vmem:[%s8 + $0x18] sm:$0xf]
    %v896 = vld [vmem:[%s8 + $0x1c] sm:$0xf]
    %v897 = vld [vmem:[%s8 + $0x20] sm:$0xf]
    %v898 = vld [vmem:[%s8 + $0x24] sm:$0xf]
    %v899 = vld [vmem:[%s8 + $0x28] sm:$0xf]
    %v900 = vld [vmem:[%s8 + $0x2c] sm:$0xf]
    %v901 = vld [vmem:[%s8 + $0x30] sm:$0xf]
    %v902 = vld [vmem:[%s8 + $0x34] sm:$0xf]
    %v903 = vld [vmem:[%s8 + $0x38] sm:$0xf]
    %v904 = vld [vmem:[%s8 + $0x3c] sm:$0xf]
    %v905 = vld [vmem:[%s8 + $0x40] sm:$0xf]
    %v906 = vld [vmem:[%s8 + $0x44] sm:$0xf]
    %v907 = vld [vmem:[%s8 + $0x48] sm:$0xf]
    %v908 = vld [vmem:[%s8 + $0x4c] sm:$0xf]
    %v909 = vld [vmem:[%s8 + $0x50] sm:$0xf]
    %v910 = vld [vmem:[%s8 + $0x54] sm:$0xf]
    %v911 = vld [vmem:[%s8 + $0x58] sm:$0xf]
    %v912 = vld [vmem:[%s8 + $0x5c] sm:$0xf]
    %v913 = vld [vmem:[%s8 + $0x60] sm:$0xf]
    %v914 = vld [vmem:[%s8 + $0x64] sm:$0xf]
    %v915 = vld [vmem:[%s8 + $0x68] sm:$0xf]
    %v916 = vld [vmem:[%s8 + $0x6c] sm:$0xf]
    %v917 = vld [vmem:[%s8 + $0x70] sm:$0xf]
    %v918 = vld [vmem:[%s8 + $0x74] sm:$0xf]
    %v919 = vld [vmem:[%s8 + $0x78] sm:$0xf]
    %v920 = vld [vmem:[%s8 + $0x7c] sm:$0xf]
    %v921 = vld [vmem:[%s9] sm:$0xff]
    %v922 = vld [vmem:[%s9 + $0x8] sm:$0xff]
    %v923 = vld [vmem:[%s9 + $0x10] sm:$0xff]
    %v924 = vld [vmem:[%s9 + $0x18] sm:$0xff]
    %v925 = vld [vmem:[#allocation7] sm:$0x1]
    %v926 = vld [vmem:[#allocation9] sm:$0x1]
    %v927 = vadd.f32 %v881, %v885
    %v928 = vrot.slane %v927, 4
    %v929 = vadd.f32 %v927, %v928
    %v930 = vrot.slane %v929, 2
    %v931 = vadd.f32 %v929, %v930
    %v932 = vrot.slane %v931, 1
    %v933 = vadd.f32 %v931, %v932
    %v934 = vadd.f32 %v883, %v887
    %v935 = vrot.slane %v934, 4
    %v936 = vadd.f32 %v934, %v935
    %v937 = vrot.slane %v936, 2
    %v938 = vadd.f32 %v936, %v937
    %v939 = vrot.slane %v938, 1
    %v940 = vadd.f32 %v938, %v939
    %v941 = vmul.f32 %v881, %v881
    %v942 = vmul.f32 %v883, %v883
    %v943 = vmul.f32 %v885, %v885
    %v944 = vmul.f32 %v887, %v887
    %v945 = vadd.f32 %v941, %v943
    %v946 = vrot.slane %v945, 4
    %v947 = vadd.f32 %v945, %v946
    %v948 = vrot.slane %v947, 2
    %v949 = vadd.f32 %v947, %v948
    %v950 = vrot.slane %v949, 1
    %v951 = vadd.f32 %v949, %v950
    %v952 = vadd.f32 %v942, %v944
    %v953 = vrot.slane %v952, 4
    %v954 = vadd.f32 %v952, %v953
    %v955 = vrot.slane %v954, 2
    %v956 = vadd.f32 %v954, %v955
    %v957 = vrot.slane %v956, 1
    %v958 = vadd.f32 %v956, %v957
    %v959 = vmul.f32 %v227, %v933
    %v960 = vmul.f32 %v227, %v940
    %v961 = vmul.f32 %v228, %v951
    %v962 = vmul.f32 %v228, %v958
    %v963 = vadd.f32 %v959, %v961
    %v964 = vadd.f32 %v960, %v962
    %v965 = vunpack.c.l.bf16 %v889
    %v966 = vunpack.c.l.bf16 %v890
    %v967 = vunpack.c.l.bf16 %v891
    %v968 = vunpack.c.l.bf16 %v892
    %v969 = vunpack.c.l.bf16 %v893
    %v970 = vunpack.c.l.bf16 %v894
    %v971 = vunpack.c.l.bf16 %v895
    %v972 = vunpack.c.l.bf16 %v896
    %v973 = vunpack.c.l.bf16 %v897
    %v974 = vunpack.c.l.bf16 %v898
    %v975 = vunpack.c.l.bf16 %v899
    %v976 = vunpack.c.l.bf16 %v900
    %v977 = vunpack.c.l.bf16 %v901
    %v978 = vunpack.c.l.bf16 %v902
    %v979 = vunpack.c.l.bf16 %v903
    %v980 = vunpack.c.l.bf16 %v904
    %v981 = vunpack.c.l.bf16 %v905
    %v982 = vunpack.c.l.bf16 %v906
    %v983 = vunpack.c.l.bf16 %v907
    %v984 = vunpack.c.l.bf16 %v908
    %v985 = vunpack.c.l.bf16 %v909
    %v986 = vunpack.c.l.bf16 %v910
    %v987 = vunpack.c.l.bf16 %v911
    %v988 = vunpack.c.l.bf16 %v912
    %v989 = vunpack.c.l.bf16 %v913
    %v990 = vunpack.c.l.bf16 %v914
    %v991 = vunpack.c.l.bf16 %v915
    %v992 = vunpack.c.l.bf16 %v916
    %v993 = vunpack.c.l.bf16 %v917
    %v994 = vunpack.c.l.bf16 %v918
    %v995 = vunpack.c.l.bf16 %v919
    %v996 = vunpack.c.l.bf16 %v920
    %997 = vmatprep.subr.mxu0 0.0
    %998 = vmatpush1.msra.mxu0 %v980
    %999 = vmatprep.subr.mxu0 0.0
    %1000 = vmatpush1.msra.mxu0 %v979
    %1001 = vmatprep.subr.mxu0 0.0
    %1002 = vmatpush1.msra.mxu0 %v978
    %1003 = vmatprep.subr.mxu0 0.0
    %1004 = vmatpush1.msra.mxu0 %v977
    %1005 = vmatprep.subr.mxu0 0.0
    %1006 = vmatpush1.msra.mxu0 %v976
    %1007 = vmatprep.subr.mxu0 0.0
    %1008 = vmatpush1.msra.mxu0 %v975
    %1009 = vmatprep.subr.mxu0 0.0
    %1010 = vmatpush1.msra.mxu0 %v974
    %1011 = vmatprep.subr.mxu0 0.0
    %1012 = vmatpush1.msra.mxu0 %v973
    %1013 = vmatprep.subr.mxu0 0.0
    %1014 = vmatpush1.msra.mxu0 %v972
    %1015 = vmatprep.subr.mxu0 0.0
    %1016 = vmatpush1.msra.mxu0 %v971
    %1017 = vmatprep.subr.mxu0 0.0
    %1018 = vmatpush1.msra.mxu0 %v970
    %1019 = vmatprep.subr.mxu0 0.0
    %1020 = vmatpush1.msra.mxu0 %v969
    %1021 = vmatprep.subr.mxu0 0.0
    %1022 = vmatpush1.msra.mxu0 %v968
    %1023 = vmatprep.subr.mxu0 0.0
    %1024 = vmatpush1.msra.mxu0 %v967
    %1025 = vmatprep.subr.mxu0 0.0
    %1026 = vmatpush1.msra.mxu0 %v966
    %1027 = vmatprep.subr.mxu0 0.0
    %1028 = vmatpush1.msra.mxu0 %v965
    %1029 = vmatprep.subr.mxu0 0.0
    %1030 = vmatpush2.msra.mxu0 %v996
    %1031 = vmatprep.subr.mxu0 0.0
    %1032 = vmatpush2.msra.mxu0 %v995
    %1033 = vmatprep.subr.mxu0 0.0
    %1034 = vmatpush2.msra.mxu0 %v994
    %1035 = vmatprep.subr.mxu0 0.0
    %1036 = vmatpush2.msra.mxu0 %v993
    %1037 = vmatprep.subr.mxu0 0.0
    %1038 = vmatpush2.msra.mxu0 %v992
    %1039 = vmatprep.subr.mxu0 0.0
    %1040 = vmatpush2.msra.mxu0 %v991
    %1041 = vmatprep.subr.mxu0 0.0
    %1042 = vmatpush2.msra.mxu0 %v990
    %1043 = vmatprep.subr.mxu0 0.0
    %1044 = vmatpush2.msra.mxu0 %v989
    %1045 = vmatprep.subr.mxu0 0.0
    %1046 = vmatpush2.msra.mxu0 %v988
    %1047 = vmatprep.subr.mxu0 0.0
    %1048 = vmatpush2.msra.mxu0 %v987
    %1049 = vmatprep.subr.mxu0 0.0
    %1050 = vmatpush2.msra.mxu0 %v986
    %1051 = vmatprep.subr.mxu0 0.0
    %1052 = vmatpush2.msra.mxu0 %v985
    %1053 = vmatprep.subr.mxu0 0.0
    %1054 = vmatpush2.msra.mxu0 %v984
    %1055 = vmatprep.subr.mxu0 0.0
    %1056 = vmatpush2.msra.mxu0 %v983
    %1057 = vmatprep.subr.mxu0 0.0
    %1058 = vmatpush2.msra.mxu0 %v982
    %1059 = vmatprep.subr.mxu0 0.0
    %1060 = vmatpush2.msra.mxu0 %v981
    %1061 = vmatprep.mubr.f32.mxu0 %v964
    %1062 = vmatmul.mubr.f32.gmra.mxu0 %v963
    %v1063 = vpop.f32.mrf.mxu0
    %v1064 = vadd.f32 0.0, %v1063
    %v1065 = vpop.f32.mrf.mxu0
    %1066 = vdwg.mxu0
    %v1067 = vrcp.pop 16.0
    %v1068 = vmul.f32 %v1064, %v1067
    %v1069 = vmul.f32 %v1068, %v1068
    %v1071 = vrot.slane %v1069, 7
    %v1073 = vsub.f32 %v1068, %v1071
    %v1074 = vmax.f32 %v1073, 0.0
    %v1075 = vadd.f32 %v1074, 1e-05
    %v1076 = vrsqrt.pop %v1075
    %v1079 = vunpack.c.l.s4 1966171168
    %v1080 = vunpack.c.0.s8 %v1079
    %v1081 = vlaneseq
    %v1082 = vshrl.u32 %v1081, 7
    %v1083 = vsub.s32 %v1080, %v1082
    %v1084 = vrot.slane %v1076, %v1083
    %v1085 = vcombine.high %v1084, %v1084
    %v1087 = vunpack.c.l.s4 1966171168
    %v1088 = vunpack.c.0.s8 %v1087
    %v1089 = vlaneseq
    %v1090 = vshrl.u32 %v1089, 7
    %v1091 = vsub.s32 %v1088, %v1090
    %v1092 = vrot.slane %v1085, %v1091
    %v1094 = vmul.f32 %v925, %v1092
    %v1095 = vmul.f32 %v1068, %v1094
    %v1096 = vsub.f32 %v926, %v1095
    %v1098 = vlaneseq
    %v1099 = vshrl.u32 %v1098, 7
    %v1100 = vsub.s32 0, %v1099
    %v1101 = vrot.slane %v1094, %v1100
    %v1103 = vmul.f32 %v227, %v1101
    %v1105 = vlaneseq
    %v1106 = vshrl.u32 %v1105, 7
    %v1107 = vsub.s32 0, %v1106
    %v1108 = vrot.slane %v1096, %v1107
    %v1110 = vmul.f32 %v228, %v1108
    %v1111 = vadd.f32 %v1103, %v1110
    %v1112 = vunpack.c.l.bf16 %v921
    %v1113 = vunpack.c.h.bf16 %v921
    %v1114 = vunpack.c.l.bf16 %v922
    %v1115 = vunpack.c.h.bf16 %v922
    %v1116 = vunpack.c.l.bf16 %v923
    %v1117 = vunpack.c.h.bf16 %v923
    %v1118 = vunpack.c.l.bf16 %v924
    %v1119 = vunpack.c.h.bf16 %v924
    %vm1120 = vcmask 261120
    %v1122 = vsel %vm1120, %v1111, 0
    %1124 = vmatprep.subr.mxu0 0.0
    %1125 = vmatpush1.msra.mxu0 0.0
    %1126 = vmatprep.subr.mxu0 0.0
    %1127 = vmatpush1.msra.mxu0 0.0
    %1128 = vmatprep.subr.mxu0 0.0
    %1129 = vmatpush1.msra.mxu0 0.0
    %1130 = vmatprep.subr.mxu0 0.0
    %1131 = vmatpush1.msra.mxu0 0.0
    %1132 = vmatprep.subr.mxu0 0.0
    %1133 = vmatpush1.msra.mxu0 0.0
    %1134 = vmatprep.subr.mxu0 0.0
    %1135 = vmatpush1.msra.mxu0 0.0
    %1136 = vmatprep.subr.mxu0 0.0
    %1137 = vmatpush1.msra.mxu0 0.0
    %1138 = vmatprep.subr.mxu0 0.0
    %1139 = vmatpush1.msra.mxu0 0.0
    %1140 = vmatprep.subr.mxu0 0.0
    %1141 = vmatpush1.msra.mxu0 0.0
    %1142 = vmatprep.subr.mxu0 0.0
    %1143 = vmatpush1.msra.mxu0 0.0
    %1144 = vmatprep.subr.mxu0 0.0
    %1145 = vmatpush1.msra.mxu0 0.0
    %1146 = vmatprep.subr.mxu0 0.0
    %1147 = vmatpush1.msra.mxu0 0.0
    %1148 = vmatprep.subr.mxu0 %v1119
    %1149 = vmatpush1.msra.mxu0 %v1118
    %1150 = vmatprep.subr.mxu0 %v1117
    %1151 = vmatpush1.msra.mxu0 %v1116
    %1152 = vmatprep.subr.mxu0 %v1115
    %1153 = vmatpush1.msra.mxu0 %v1114
    %1154 = vmatprep.subr.mxu0 %v1113
    %1155 = vmatpush1.msra.mxu0 %v1112
    %1156 = vmatprep.subr.mxu0 0.0
    %1157 = vmatpush2.msra.mxu0 0.0
    %1158 = vmatprep.subr.mxu0 0.0
    %1159 = vmatpush2.msra.mxu0 0.0
    %1160 = vmatprep.subr.mxu0 0.0
    %1161 = vmatpush2.msra.mxu0 0.0
    %1162 = vmatprep.subr.mxu0 0.0
    %1163 = vmatpush2.msra.mxu0 0.0
    %1164 = vmatprep.subr.mxu0 0.0
    %1165 = vmatpush2.msra.mxu0 0.0
    %1166 = vmatprep.subr.mxu0 0.0
    %1167 = vmatpush2.msra.mxu0 0.0
    %1168 = vmatprep.subr.mxu0 0.0
    %1169 = vmatpush2.msra.mxu0 0.0
    %1170 = vmatprep.subr.mxu0 0.0
    %1171 = vmatpush2.msra.mxu0 0.0
    %1172 = vmatprep.subr.mxu0 0.0
    %1173 = vmatpush2.msra.mxu0 0.0
    %1174 = vmatprep.subr.mxu0 0.0
    %1175 = vmatpush2.msra.mxu0 0.0
    %1176 = vmatprep.subr.mxu0 0.0
    %1177 = vmatpush2.msra.mxu0 0.0
    %1178 = vmatprep.subr.mxu0 0.0
    %1179 = vmatpush2.msra.mxu0 0.0
    %1180 = vmatprep.subr.mxu0 0.0
    %1181 = vmatpush2.msra.mxu0 0.0
    %1182 = vmatprep.subr.mxu0 0.0
    %1183 = vmatpush2.msra.mxu0 0.0
    %1184 = vmatprep.subr.mxu0 0.0
    %1185 = vmatpush2.msra.mxu0 0.0
    %1186 = vmatprep.subr.mxu0 0.0
    %1187 = vmatpush2.msra.mxu0 0.0
    %1188 = vmatprep.mubr.f32.mxu0 0.0
    %1189 = vmatmul.mubr.f32.gmra.mxu0 %v1122
    %v1190 = vpop.f32.mrf.mxu0
    %v1191 = vadd.f32 0.0, %v1190
    %v1192 = vpop.f32.mrf.mxu0
    %v1193 = vadd.f32 0.0, %v1192
    %1194 = vdwg.mxu0
    %v1195 = vlaneseq
    %v1196 = vshrl.u32 %v1195, 7
    %v1197 = vsub.s32 0, %v1196
    %v1198 = vrot.slane %v1191, %v1197
    %v1199 = vlaneseq
    %v1200 = vshrl.u32 %v1199, 7
    %v1201 = vsub.s32 0, %v1200
    %v1202 = vrot.slane %v1193, %v1201
    %v1203 = vmul.f32 %v881, %v1198
    %v1204 = vmul.f32 %v883, %v1202
    %v1205 = vmul.f32 %v885, %v1198
    %v1206 = vmul.f32 %v887, %v1202
    %v1207 = vlaneseq
    %v1208 = vshrl.u32 %v1207, 7
    %v1209 = vsub.s32 1, %v1208
    %v1210 = vrot.slane %v1191, %v1209
    %v1211 = vlaneseq
    %v1212 = vshrl.u32 %v1211, 7
    %v1213 = vsub.s32 1, %v1212
    %v1214 = vrot.slane %v1193, %v1213
    %v1215 = vadd.f32 %v1203, %v1210
    %v1216 = vadd.f32 %v1204, %v1214
    %v1217 = vadd.f32 %v1205, %v1210
    %v1218 = vadd.f32 %v1206, %v1214
    %v1219 = vmax.f32 %v1215, 0.0
    %v1220 = vmax.f32 %v1216, 0.0
    %v1221 = vmax.f32 %v1217, 0.0
    %v1222 = vmax.f32 %v1218, 0.0
    %v1223 = vmul.f32 %v1219, %v641
    %v1224 = vmul.f32 %v1220, %v641
    %v1225 = vmul.f32 %v1221, %v646
    %v1226 = vmul.f32 %v1222, %v646
    %v1227 = vpack.c.bf16 %v1225, %v1223
    %v1228 = vpack.c.bf16 %v1226, %v1224
    %v1229 = vld [vmem:[%s12] sm:$0xff]
    %v1230 = vld [vmem:[%s12 + $0x8] sm:$0xff]
    %v1231 = vld [vmem:[%s12 + $0x10] sm:$0xff]
    %v1232 = vld [vmem:[%s12 + $0x18] sm:$0xff]
    %v1233 = vld [vmem:[%s12 + $0x20] sm:$0xff]
    %v1234 = vld [vmem:[%s12 + $0x28] sm:$0xff]
    %v1235 = vld [vmem:[%s12 + $0x30] sm:$0xff]
    %v1236 = vld [vmem:[%s12 + $0x38] sm:$0xff]
    %v1237 = vld [vmem:[%s12 + $0x40] sm:$0xff]
    %v1238 = vld [vmem:[%s12 + $0x48] sm:$0xff]
    %v1239 = vld [vmem:[%s12 + $0x50] sm:$0xff]
    %v1240 = vld [vmem:[%s12 + $0x58] sm:$0xff]
    %v1241 = vld [vmem:[%s12 + $0x60] sm:$0xff]
    %v1242 = vld [vmem:[%s12 + $0x68] sm:$0xff]
    %v1243 = vld [vmem:[%s12 + $0x70] sm:$0xff]
    %v1244 = vld [vmem:[%s12 + $0x78] sm:$0xff]
    %v1245 = vld [vmem:[%s12 + $0x80] sm:$0xff]
    %v1246 = vld [vmem:[%s12 + $0x88] sm:$0xff]
    %v1247 = vld [vmem:[%s12 + $0x90] sm:$0xff]
    %v1248 = vld [vmem:[%s12 + $0x98] sm:$0xff]
    %v1249 = vld [vmem:[%s12 + $0xa0] sm:$0xff]
    %v1250 = vld [vmem:[%s12 + $0xa8] sm:$0xff]
    %v1251 = vld [vmem:[%s12 + $0xb0] sm:$0xff]
    %v1252 = vld [vmem:[%s12 + $0xb8] sm:$0xff]
    %v1253 = vld [vmem:[%s12 + $0xc0] sm:$0xff]
    %v1254 = vld [vmem:[%s12 + $0xc8] sm:$0xff]
    %v1255 = vld [vmem:[%s12 + $0xd0] sm:$0xff]
    %v1256 = vld [vmem:[%s12 + $0xd8] sm:$0xff]
    %v1257 = vld [vmem:[%s12 + $0xe0] sm:$0xff]
    %v1258 = vld [vmem:[%s12 + $0xe8] sm:$0xff]
    %v1259 = vld [vmem:[%s12 + $0xf0] sm:$0xff]
    %v1260 = vld [vmem:[%s12 + $0xf8] sm:$0xff]
    %v1293 = vunpack.c.l.b16 %v1229
    %v1294 = vunpack.c.h.b16 %v1229
    %v1295 = vunpack.c.l.b16 %v1230
    %v1296 = vunpack.c.h.b16 %v1230
    %v1297 = vunpack.c.l.b16 %v1231
    %v1298 = vunpack.c.h.b16 %v1231
    %v1299 = vunpack.c.l.b16 %v1232
    %v1300 = vunpack.c.h.b16 %v1232
    %v1301 = vunpack.c.l.b16 %v1233
    %v1302 = vunpack.c.h.b16 %v1233
    %v1303 = vunpack.c.l.b16 %v1234
    %v1304 = vunpack.c.h.b16 %v1234
    %v1305 = vunpack.c.l.b16 %v1235
    %v1306 = vunpack.c.h.b16 %v1235
    %v1307 = vunpack.c.l.b16 %v1236
    %v1308 = vunpack.c.h.b16 %v1236
    %v1309 = vunpack.c.l.b16 %v1237
    %v1310 = vunpack.c.h.b16 %v1237
    %v1311 = vunpack.c.l.b16 %v1238
    %v1312 = vunpack.c.h.b16 %v1238
    %v1313 = vunpack.c.l.b16 %v1239
    %v1314 = vunpack.c.h.b16 %v1239
    %v1315 = vunpack.c.l.b16 %v1240
    %v1316 = vunpack.c.h.b16 %v1240
    %v1317 = vunpack.c.l.b16 %v1241
    %v1318 = vunpack.c.h.b16 %v1241
    %v1319 = vunpack.c.l.b16 %v1242
    %v1320 = vunpack.c.h.b16 %v1242
    %v1321 = vunpack.c.l.b16 %v1243
    %v1322 = vunpack.c.h.b16 %v1243
    %v1323 = vunpack.c.l.b16 %v1244
    %v1324 = vunpack.c.h.b16 %v1244
    %v1325 = vunpack.c.l.b16 %v1245
    %v1326 = vunpack.c.h.b16 %v1245
    %v1327 = vunpack.c.l.b16 %v1246
    %v1328 = vunpack.c.h.b16 %v1246
    %v1329 = vunpack.c.l.b16 %v1247
    %v1330 = vunpack.c.h.b16 %v1247
    %v1331 = vunpack.c.l.b16 %v1248
    %v1332 = vunpack.c.h.b16 %v1248
    %v1333 = vunpack.c.l.b16 %v1249
    %v1334 = vunpack.c.h.b16 %v1249
    %v1335 = vunpack.c.l.b16 %v1250
    %v1336 = vunpack.c.h.b16 %v1250
    %v1337 = vunpack.c.l.b16 %v1251
    %v1338 = vunpack.c.h.b16 %v1251
    %v1339 = vunpack.c.l.b16 %v1252
    %v1340 = vunpack.c.h.b16 %v1252
    %v1341 = vunpack.c.l.b16 %v1253
    %v1342 = vunpack.c.h.b16 %v1253
    %v1343 = vunpack.c.l.b16 %v1254
    %v1344 = vunpack.c.h.b16 %v1254
    %v1345 = vunpack.c.l.b16 %v1255
    %v1346 = vunpack.c.h.b16 %v1255
    %v1347 = vunpack.c.l.b16 %v1256
    %v1348 = vunpack.c.h.b16 %v1256
    %v1349 = vunpack.c.l.b16 %v1257
    %v1350 = vunpack.c.h.b16 %v1257
    %v1351 = vunpack.c.l.b16 %v1258
    %v1352 = vunpack.c.h.b16 %v1258
    %v1353 = vunpack.c.l.b16 %v1259
    %v1354 = vunpack.c.h.b16 %v1259
    %v1355 = vunpack.c.l.b16 %v1260
    %v1356 = vunpack.c.h.b16 %v1260
    %v1357 = vpack.c.b16 %v1295, %v1293
    %v1358 = vpack.c.b16 %v1296, %v1294
    %v1359 = vpack.c.b16 %v1299, %v1297
    %v1360 = vpack.c.b16 %v1300, %v1298
    %v1361 = vpack.c.b16 %v1303, %v1301
    %v1362 = vpack.c.b16 %v1304, %v1302
    %v1363 = vpack.c.b16 %v1307, %v1305
    %v1364 = vpack.c.b16 %v1308, %v1306
    %v1365 = vpack.c.b16 %v1311, %v1309
    %v1366 = vpack.c.b16 %v1312, %v1310
    %v1367 = vpack.c.b16 %v1315, %v1313
    %v1368 = vpack.c.b16 %v1316, %v1314
    %v1369 = vpack.c.b16 %v1319, %v1317
    %v1370 = vpack.c.b16 %v1320, %v1318
    %v1371 = vpack.c.b16 %v1323, %v1321
    %v1372 = vpack.c.b16 %v1324, %v1322
    %v1373 = vpack.c.b16 %v1327, %v1325
    %v1374 = vpack.c.b16 %v1328, %v1326
    %v1375 = vpack.c.b16 %v1331, %v1329
    %v1376 = vpack.c.b16 %v1332, %v1330
    %v1377 = vpack.c.b16 %v1335, %v1333
    %v1378 = vpack.c.b16 %v1336, %v1334
    %v1379 = vpack.c.b16 %v1339, %v1337
    %v1380 = vpack.c.b16 %v1340, %v1338
    %v1381 = vpack.c.b16 %v1343, %v1341
    %v1382 = vpack.c.b16 %v1344, %v1342
    %v1383 = vpack.c.b16 %v1347, %v1345
    %v1384 = vpack.c.b16 %v1348, %v1346
    %v1385 = vpack.c.b16 %v1351, %v1349
    %v1386 = vpack.c.b16 %v1352, %v1350
    %v1387 = vpack.c.b16 %v1355, %v1353
    %v1388 = vpack.c.b16 %v1356, %v1354
    %1421 = vmatprep.subr.bf16.mxu0 %v1372
    %1422 = vmatpush1.bf16.msra.mxu0 %v1371
    %1423 = vmatprep.subr.bf16.mxu0 %v1370
    %1424 = vmatpush1.bf16.msra.mxu0 %v1369
    %1425 = vmatprep.subr.bf16.mxu0 %v1368
    %1426 = vmatpush1.bf16.msra.mxu0 %v1367
    %1427 = vmatprep.subr.bf16.mxu0 %v1366
    %1428 = vmatpush1.bf16.msra.mxu0 %v1365
    %1429 = vmatprep.subr.bf16.mxu0 %v1364
    %1430 = vmatpush1.bf16.msra.mxu0 %v1363
    %1431 = vmatprep.subr.bf16.mxu0 %v1362
    %1432 = vmatpush1.bf16.msra.mxu0 %v1361
    %1433 = vmatprep.subr.bf16.mxu0 %v1360
    %1434 = vmatpush1.bf16.msra.mxu0 %v1359
    %1435 = vmatprep.subr.bf16.mxu0 %v1358
    %1436 = vmatpush1.bf16.msra.mxu0 %v1357
    %1437 = vmatprep.subr.bf16.mxu0 %v1388
    %1438 = vmatpush2.bf16.msra.mxu0 %v1387
    %1439 = vmatprep.subr.bf16.mxu0 %v1386
    %1440 = vmatpush2.bf16.msra.mxu0 %v1385
    %1441 = vmatprep.subr.bf16.mxu0 %v1384
    %1442 = vmatpush2.bf16.msra.mxu0 %v1383
    %1443 = vmatprep.subr.bf16.mxu0 %v1382
    %1444 = vmatpush2.bf16.msra.mxu0 %v1381
    %1445 = vmatprep.subr.bf16.mxu0 %v1380
    %1446 = vmatpush2.bf16.msra.mxu0 %v1379
    %1447 = vmatprep.subr.bf16.mxu0 %v1378
    %1448 = vmatpush2.bf16.msra.mxu0 %v1377
    %1449 = vmatprep.subr.bf16.mxu0 %v1376
    %1450 = vmatpush2.bf16.msra.mxu0 %v1375
    %1451 = vmatprep.subr.bf16.mxu0 %v1374
    %1452 = vmatpush2.bf16.msra.mxu0 %v1373
    %1453 = vmatprep.mubr.bf16.mxu0 %v1228
    %1454 = vmatmul.mubr.bf16.gmra.mxu0 %v1227
    %v1455 = vpop.f32.mrf.mxu0
    %v1456 = vadd.f32 0.0, %v1455
    %v1457 = vpop.f32.mrf.mxu0
    %v1458 = vadd.f32 0.0, %v1457
    %v1459 = vpop.f32.mrf.mxu0
    %v1460 = vadd.f32 0.0, %v1459
    %v1461 = vpop.f32.mrf.mxu0
    %v1462 = vadd.f32 0.0, %v1461
    %1463 = vdwg.mxu0
    %v1464 = vld [vmem:[%s13] sm:$0xf]
    %v1465 = vld [vmem:[%s13 + $0x4] sm:$0xf]
    %v1466 = vld [vmem:[%s13 + $0x8] sm:$0xf]
    %v1467 = vld [vmem:[%s13 + $0xc] sm:$0xf]
    %v1468 = vld [vmem:[%s13 + $0x10] sm:$0xf]
    %v1469 = vld [vmem:[%s13 + $0x14] sm:$0xf]
    %v1470 = vld [vmem:[%s13 + $0x18] sm:$0xf]
    %v1471 = vld [vmem:[%s13 + $0x1c] sm:$0xf]
    %v1472 = vld [vmem:[%s13 + $0x20] sm:$0xf]
    %v1473 = vld [vmem:[%s13 + $0x24] sm:$0xf]
    %v1474 = vld [vmem:[%s13 + $0x28] sm:$0xf]
    %v1475 = vld [vmem:[%s13 + $0x2c] sm:$0xf]
    %v1476 = vld [vmem:[%s13 + $0x30] sm:$0xf]
    %v1477 = vld [vmem:[%s13 + $0x34] sm:$0xf]
    %v1478 = vld [vmem:[%s13 + $0x38] sm:$0xf]
    %v1479 = vld [vmem:[%s13 + $0x3c] sm:$0xf]
    %v1480 = vld [vmem:[%s13 + $0x40] sm:$0xf]
    %v1481 = vld [vmem:[%s13 + $0x44] sm:$0xf]
    %v1482 = vld [vmem:[%s13 + $0x48] sm:$0xf]
    %v1483 = vld [vmem:[%s13 + $0x4c] sm:$0xf]
    %v1484 = vld [vmem:[%s13 + $0x50] sm:$0xf]
    %v1485 = vld [vmem:[%s13 + $0x54] sm:$0xf]
    %v1486 = vld [vmem:[%s13 + $0x58] sm:$0xf]
    %v1487 = vld [vmem:[%s13 + $0x5c] sm:$0xf]
    %v1488 = vld [vmem:[%s13 + $0x60] sm:$0xf]
    %v1489 = vld [vmem:[%s13 + $0x64] sm:$0xf]
    %v1490 = vld [vmem:[%s13 + $0x68] sm:$0xf]
    %v1491 = vld [vmem:[%s13 + $0x6c] sm:$0xf]
    %v1492 = vld [vmem:[%s13 + $0x70] sm:$0xf]
    %v1493 = vld [vmem:[%s13 + $0x74] sm:$0xf]
    %v1494 = vld [vmem:[%s13 + $0x78] sm:$0xf]
    %v1495 = vld [vmem:[%s13 + $0x7c] sm:$0xf]
    %v1496 = vld [vmem:[%s14] sm:$0xff]
    %v1497 = vld [vmem:[%s14 + $0x8] sm:$0xff]
    %v1498 = vld [vmem:[#allocation10] sm:$0x1]
    %v1499 = vld [vmem:[#allocation12] sm:$0x1]
    %v1500 = vadd.f32 %v1456, %v1460
    %v1501 = vrot.slane %v1500, 4
    %v1502 = vadd.f32 %v1500, %v1501
    %v1503 = vrot.slane %v1502, 2
    %v1504 = vadd.f32 %v1502, %v1503
    %v1505 = vrot.slane %v1504, 1
    %v1506 = vadd.f32 %v1504, %v1505
    %v1507 = vadd.f32 %v1458, %v1462
    %v1508 = vrot.slane %v1507, 4
    %v1509 = vadd.f32 %v1507, %v1508
    %v1510 = vrot.slane %v1509, 2
    %v1511 = vadd.f32 %v1509, %v1510
    %v1512 = vrot.slane %v1511, 1
    %v1513 = vadd.f32 %v1511, %v1512
    %v1514 = vmul.f32 %v1456, %v1456
    %v1515 = vmul.f32 %v1458, %v1458
    %v1516 = vmul.f32 %v1460, %v1460
    %v1517 = vmul.f32 %v1462, %v1462
    %v1518 = vadd.f32 %v1514, %v1516
    %v1519 = vrot.slane %v1518, 4
    %v1520 = vadd.f32 %v1518, %v1519
    %v1521 = vrot.slane %v1520, 2
    %v1522 = vadd.f32 %v1520, %v1521
    %v1523 = vrot.slane %v1522, 1
    %v1524 = vadd.f32 %v1522, %v1523
    %v1525 = vadd.f32 %v1515, %v1517
    %v1526 = vrot.slane %v1525, 4
    %v1527 = vadd.f32 %v1525, %v1526
    %v1528 = vrot.slane %v1527, 2
    %v1529 = vadd.f32 %v1527, %v1528
    %v1530 = vrot.slane %v1529, 1
    %v1531 = vadd.f32 %v1529, %v1530
    %v1532 = vmul.f32 %v227, %v1506
    %v1533 = vmul.f32 %v227, %v1513
    %v1534 = vmul.f32 %v228, %v1524
    %v1535 = vmul.f32 %v228, %v1531
    %v1536 = vadd.f32 %v1532, %v1534
    %v1537 = vadd.f32 %v1533, %v1535
    %v1538 = vunpack.c.l.bf16 %v1464
    %v1539 = vunpack.c.l.bf16 %v1465
    %v1540 = vunpack.c.l.bf16 %v1466
    %v1541 = vunpack.c.l.bf16 %v1467
    %v1542 = vunpack.c.l.bf16 %v1468
    %v1543 = vunpack.c.l.bf16 %v1469
    %v1544 = vunpack.c.l.bf16 %v1470
    %v1545 = vunpack.c.l.bf16 %v1471
    %v1546 = vunpack.c.l.bf16 %v1472
    %v1547 = vunpack.c.l.bf16 %v1473
    %v1548 = vunpack.c.l.bf16 %v1474
    %v1549 = vunpack.c.l.bf16 %v1475
    %v1550 = vunpack.c.l.bf16 %v1476
    %v1551 = vunpack.c.l.bf16 %v1477
    %v1552 = vunpack.c.l.bf16 %v1478
    %v1553 = vunpack.c.l.bf16 %v1479
    %v1554 = vunpack.c.l.bf16 %v1480
    %v1555 = vunpack.c.l.bf16 %v1481
    %v1556 = vunpack.c.l.bf16 %v1482
    %v1557 = vunpack.c.l.bf16 %v1483
    %v1558 = vunpack.c.l.bf16 %v1484
    %v1559 = vunpack.c.l.bf16 %v1485
    %v1560 = vunpack.c.l.bf16 %v1486
    %v1561 = vunpack.c.l.bf16 %v1487
    %v1562 = vunpack.c.l.bf16 %v1488
    %v1563 = vunpack.c.l.bf16 %v1489
    %v1564 = vunpack.c.l.bf16 %v1490
    %v1565 = vunpack.c.l.bf16 %v1491
    %v1566 = vunpack.c.l.bf16 %v1492
    %v1567 = vunpack.c.l.bf16 %v1493
    %v1568 = vunpack.c.l.bf16 %v1494
    %v1569 = vunpack.c.l.bf16 %v1495
    %1570 = vmatprep.subr.mxu0 0.0
    %1571 = vmatpush1.msra.mxu0 %v1553
    %1572 = vmatprep.subr.mxu0 0.0
    %1573 = vmatpush1.msra.mxu0 %v1552
    %1574 = vmatprep.subr.mxu0 0.0
    %1575 = vmatpush1.msra.mxu0 %v1551
    %1576 = vmatprep.subr.mxu0 0.0
    %1577 = vmatpush1.msra.mxu0 %v1550
    %1578 = vmatprep.subr.mxu0 0.0
    %1579 = vmatpush1.msra.mxu0 %v1549
    %1580 = vmatprep.subr.mxu0 0.0
    %1581 = vmatpush1.msra.mxu0 %v1548
    %1582 = vmatprep.subr.mxu0 0.0
    %1583 = vmatpush1.msra.mxu0 %v1547
    %1584 = vmatprep.subr.mxu0 0.0
    %1585 = vmatpush1.msra.mxu0 %v1546
    %1586 = vmatprep.subr.mxu0 0.0
    %1587 = vmatpush1.msra.mxu0 %v1545
    %1588 = vmatprep.subr.mxu0 0.0
    %1589 = vmatpush1.msra.mxu0 %v1544
    %1590 = vmatprep.subr.mxu0 0.0
    %1591 = vmatpush1.msra.mxu0 %v1543
    %1592 = vmatprep.subr.mxu0 0.0
    %1593 = vmatpush1.msra.mxu0 %v1542
    %1594 = vmatprep.subr.mxu0 0.0
    %1595 = vmatpush1.msra.mxu0 %v1541
    %1596 = vmatprep.subr.mxu0 0.0
    %1597 = vmatpush1.msra.mxu0 %v1540
    %1598 = vmatprep.subr.mxu0 0.0
    %1599 = vmatpush1.msra.mxu0 %v1539
    %1600 = vmatprep.subr.mxu0 0.0
    %1601 = vmatpush1.msra.mxu0 %v1538
    %1602 = vmatprep.subr.mxu0 0.0
    %1603 = vmatpush2.msra.mxu0 %v1569
    %1604 = vmatprep.subr.mxu0 0.0
    %1605 = vmatpush2.msra.mxu0 %v1568
    %1606 = vmatprep.subr.mxu0 0.0
    %1607 = vmatpush2.msra.mxu0 %v1567
    %1608 = vmatprep.subr.mxu0 0.0
    %1609 = vmatpush2.msra.mxu0 %v1566
    %1610 = vmatprep.subr.mxu0 0.0
    %1611 = vmatpush2.msra.mxu0 %v1565
    %1612 = vmatprep.subr.mxu0 0.0
    %1613 = vmatpush2.msra.mxu0 %v1564
    %1614 = vmatprep.subr.mxu0 0.0
    %1615 = vmatpush2.msra.mxu0 %v1563
    %1616 = vmatprep.subr.mxu0 0.0
    %1617 = vmatpush2.msra.mxu0 %v1562
    %1618 = vmatprep.subr.mxu0 0.0
    %1619 = vmatpush2.msra.mxu0 %v1561
    %1620 = vmatprep.subr.mxu0 0.0
    %1621 = vmatpush2.msra.mxu0 %v1560
    %1622 = vmatprep.subr.mxu0 0.0
    %1623 = vmatpush2.msra.mxu0 %v1559
    %1624 = vmatprep.subr.mxu0 0.0
    %1625 = vmatpush2.msra.mxu0 %v1558
    %1626 = vmatprep.subr.mxu0 0.0
    %1627 = vmatpush2.msra.mxu0 %v1557
    %1628 = vmatprep.subr.mxu0 0.0
    %1629 = vmatpush2.msra.mxu0 %v1556
    %1630 = vmatprep.subr.mxu0 0.0
    %1631 = vmatpush2.msra.mxu0 %v1555
    %1632 = vmatprep.subr.mxu0 0.0
    %1633 = vmatpush2.msra.mxu0 %v1554
    %1634 = vmatprep.mubr.f32.mxu0 %v1537
    %1635 = vmatmul.mubr.f32.gmra.mxu0 %v1536
    %v1636 = vpop.f32.mrf.mxu0
    %v1637 = vadd.f32 0.0, %v1636
    %v1638 = vpop.f32.mrf.mxu0
    %1639 = vdwg.mxu0
    %v1640 = vrcp.pop 32.0
    %v1641 = vmul.f32 %v1637, %v1640
    %v1642 = vmul.f32 %v1641, %v1641
    %v1644 = vrot.slane %v1642, 7
    %v1646 = vsub.f32 %v1641, %v1644
    %v1647 = vmax.f32 %v1646, 0.0
    %v1648 = vadd.f32 %v1647, 1e-05
    %v1649 = vrsqrt.pop %v1648
    %v1652 = vunpack.c.l.s4 1966171168
    %v1653 = vunpack.c.0.s8 %v1652
    %v1654 = vlaneseq
    %v1655 = vshrl.u32 %v1654, 7
    %v1656 = vsub.s32 %v1653, %v1655
    %v1657 = vrot.slane %v1649, %v1656
    %v1658 = vcombine.high %v1657, %v1657
    %v1660 = vunpack.c.l.s4 1966171168
    %v1661 = vunpack.c.0.s8 %v1660
    %v1662 = vlaneseq
    %v1663 = vshrl.u32 %v1662, 7
    %v1664 = vsub.s32 %v1661, %v1663
    %v1665 = vrot.slane %v1658, %v1664
    %v1667 = vmul.f32 %v1498, %v1665
    %v1668 = vmul.f32 %v1641, %v1667
    %v1669 = vsub.f32 %v1499, %v1668
    %v1671 = vlaneseq
    %v1672 = vshrl.u32 %v1671, 7
    %v1673 = vsub.s32 0, %v1672
    %v1674 = vrot.slane %v1667, %v1673
    %v1676 = vmul.f32 %v227, %v1674
    %v1678 = vlaneseq
    %v1679 = vshrl.u32 %v1678, 7
    %v1680 = vsub.s32 0, %v1679
    %v1681 = vrot.slane %v1669, %v1680
    %v1683 = vmul.f32 %v228, %v1681
    %v1684 = vadd.f32 %v1676, %v1683
    %v1685 = vunpack.c.l.bf16 %v1496
    %v1686 = vunpack.c.h.bf16 %v1496
    %v1687 = vunpack.c.l.bf16 %v1497
    %v1688 = vunpack.c.h.bf16 %v1497
    %vm1689 = vcmask 130048
    %v1691 = vsel %vm1689, %v1684, 0
    %1693 = vmatprep.subr.mxu0 0.0
    %1694 = vmatpush1.msra.mxu0 0.0
    %1695 = vmatprep.subr.mxu0 0.0
    %1696 = vmatpush1.msra.mxu0 0.0
    %1697 = vmatprep.subr.mxu0 0.0
    %1698 = vmatpush1.msra.mxu0 0.0
    %1699 = vmatprep.subr.mxu0 0.0
    %1700 = vmatpush1.msra.mxu0 0.0
    %1701 = vmatprep.subr.mxu0 0.0
    %1702 = vmatpush1.msra.mxu0 0.0
    %1703 = vmatprep.subr.mxu0 0.0
    %1704 = vmatpush1.msra.mxu0 0.0
    %1705 = vmatprep.subr.mxu0 0.0
    %1706 = vmatpush1.msra.mxu0 0.0
    %1707 = vmatprep.subr.mxu0 0.0
    %1708 = vmatpush1.msra.mxu0 0.0
    %1709 = vmatprep.subr.mxu0 0.0
    %1710 = vmatpush1.msra.mxu0 0.0
    %1711 = vmatprep.subr.mxu0 0.0
    %1712 = vmatpush1.msra.mxu0 0.0
    %1713 = vmatprep.subr.mxu0 0.0
    %1714 = vmatpush1.msra.mxu0 0.0
    %1715 = vmatprep.subr.mxu0 0.0
    %1716 = vmatpush1.msra.mxu0 0.0
    %1717 = vmatprep.subr.mxu0 0.0
    %1718 = vmatpush1.msra.mxu0 0.0
    %1719 = vmatprep.subr.mxu0 0.0
    %1720 = vmatpush1.msra.mxu0 0.0
    %1721 = vmatprep.subr.mxu0 %v1688
    %1722 = vmatpush1.msra.mxu0 %v1687
    %1723 = vmatprep.subr.mxu0 %v1686
    %1724 = vmatpush1.msra.mxu0 %v1685
    %1725 = vmatprep.subr.mxu0 0.0
    %1726 = vmatpush2.msra.mxu0 0.0
    %1727 = vmatprep.subr.mxu0 0.0
    %1728 = vmatpush2.msra.mxu0 0.0
    %1729 = vmatprep.subr.mxu0 0.0
    %1730 = vmatpush2.msra.mxu0 0.0
    %1731 = vmatprep.subr.mxu0 0.0
    %1732 = vmatpush2.msra.mxu0 0.0
    %1733 = vmatprep.subr.mxu0 0.0
    %1734 = vmatpush2.msra.mxu0 0.0
    %1735 = vmatprep.subr.mxu0 0.0
    %1736 = vmatpush2.msra.mxu0 0.0
    %1737 = vmatprep.subr.mxu0 0.0
    %1738 = vmatpush2.msra.mxu0 0.0
    %1739 = vmatprep.subr.mxu0 0.0
    %1740 = vmatpush2.msra.mxu0 0.0
    %1741 = vmatprep.subr.mxu0 0.0
    %1742 = vmatpush2.msra.mxu0 0.0
    %1743 = vmatprep.subr.mxu0 0.0
    %1744 = vmatpush2.msra.mxu0 0.0
    %1745 = vmatprep.subr.mxu0 0.0
    %1746 = vmatpush2.msra.mxu0 0.0
    %1747 = vmatprep.subr.mxu0 0.0
    %1748 = vmatpush2.msra.mxu0 0.0
    %1749 = vmatprep.subr.mxu0 0.0
    %1750 = vmatpush2.msra.mxu0 0.0
    %1751 = vmatprep.subr.mxu0 0.0
    %1752 = vmatpush2.msra.mxu0 0.0
    %1753 = vmatprep.subr.mxu0 0.0
    %1754 = vmatpush2.msra.mxu0 0.0
    %1755 = vmatprep.subr.mxu0 0.0
    %1756 = vmatpush2.msra.mxu0 0.0
    %1757 = vmatprep.mubr.f32.mxu0 0.0
    %1758 = vmatmul.mubr.f32.gmra.mxu0 %v1691
    %v1759 = vpop.f32.mrf.mxu0
    %v1760 = vadd.f32 0.0, %v1759
    %v1761 = vpop.f32.mrf.mxu0
    %v1762 = vadd.f32 0.0, %v1761
    %1763 = vdwg.mxu0
    %v1764 = vlaneseq
    %v1765 = vshrl.u32 %v1764, 7
    %v1766 = vsub.s32 0, %v1765
    %v1767 = vrot.slane %v1760, %v1766
    %v1768 = vlaneseq
    %v1769 = vshrl.u32 %v1768, 7
    %v1770 = vsub.s32 0, %v1769
    %v1771 = vrot.slane %v1762, %v1770
    %v1772 = vmul.f32 %v1456, %v1767
    %v1773 = vmul.f32 %v1458, %v1771
    %v1774 = vmul.f32 %v1460, %v1767
    %v1775 = vmul.f32 %v1462, %v1771
    %v1776 = vlaneseq
    %v1777 = vshrl.u32 %v1776, 7
    %v1778 = vsub.s32 1, %v1777
    %v1779 = vrot.slane %v1760, %v1778
    %v1780 = vlaneseq
    %v1781 = vshrl.u32 %v1780, 7
    %v1782 = vsub.s32 1, %v1781
    %v1783 = vrot.slane %v1762, %v1782
    %v1784 = vadd.f32 %v1772, %v1779
    %v1785 = vadd.f32 %v1773, %v1783
    %v1786 = vadd.f32 %v1774, %v1779
    %v1787 = vadd.f32 %v1775, %v1783
    %v1788 = vmax.f32 %v1784, 0.0
    %v1789 = vmax.f32 %v1785, 0.0
    %v1790 = vmax.f32 %v1786, 0.0
    %v1791 = vmax.f32 %v1787, 0.0
    %v1792 = vmul.f32 %v1788, %v641
    %v1793 = vmul.f32 %v1789, %v641
    %v1794 = vmul.f32 %v1790, %v646
    %v1795 = vmul.f32 %v1791, %v646
    %v1796 = vpack.c.bf16 %v1794, %v1792
    %v1797 = vpack.c.bf16 %v1795, %v1793
    %v1798 = vld [vmem:[#allocation13] sm:$0xff]
    %v1799 = vld [vmem:[#allocation13 + $0x8] sm:$0xff]
    %v1800 = vld [vmem:[#allocation13 + $0x10] sm:$0xff]
    %v1801 = vld [vmem:[#allocation13 + $0x18] sm:$0xff]
    %v1802 = vld [vmem:[#allocation13 + $0x20] sm:$0xff]
    %v1803 = vld [vmem:[#allocation13 + $0x28] sm:$0xff]
    %v1804 = vld [vmem:[#allocation13 + $0x30] sm:$0xff]
    %v1805 = vld [vmem:[#allocation13 + $0x38] sm:$0xff]
    %v1806 = vld [vmem:[#allocation13 + $0x40] sm:$0xff]
    %v1807 = vld [vmem:[#allocation13 + $0x48] sm:$0xff]
    %v1808 = vld [vmem:[#allocation13 + $0x50] sm:$0xff]
    %v1809 = vld [vmem:[#allocation13 + $0x58] sm:$0xff]
    %v1810 = vld [vmem:[#allocation13 + $0x60] sm:$0xff]
    %v1811 = vld [vmem:[#allocation13 + $0x68] sm:$0xff]
    %v1812 = vld [vmem:[#allocation13 + $0x70] sm:$0xff]
    %v1813 = vld [vmem:[#allocation13 + $0x78] sm:$0xff]
    %v1814 = vld [vmem:[#allocation13 + $0x80] sm:$0xff]
    %v1815 = vld [vmem:[#allocation13 + $0x88] sm:$0xff]
    %v1816 = vld [vmem:[#allocation13 + $0x90] sm:$0xff]
    %v1817 = vld [vmem:[#allocation13 + $0x98] sm:$0xff]
    %v1818 = vld [vmem:[#allocation13 + $0xa0] sm:$0xff]
    %v1819 = vld [vmem:[#allocation13 + $0xa8] sm:$0xff]
    %v1820 = vld [vmem:[#allocation13 + $0xb0] sm:$0xff]
    %v1821 = vld [vmem:[#allocation13 + $0xb8] sm:$0xff]
    %v1822 = vld [vmem:[#allocation13 + $0xc0] sm:$0xff]
    %v1823 = vld [vmem:[#allocation13 + $0xc8] sm:$0xff]
    %v1824 = vld [vmem:[#allocation13 + $0xd0] sm:$0xff]
    %v1825 = vld [vmem:[#allocation13 + $0xd8] sm:$0xff]
    %v1826 = vld [vmem:[#allocation13 + $0xe0] sm:$0xff]
    %v1827 = vld [vmem:[#allocation13 + $0xe8] sm:$0xff]
    %v1828 = vld [vmem:[#allocation13 + $0xf0] sm:$0xff]
    %v1829 = vld [vmem:[#allocation13 + $0xf8] sm:$0xff]
    %v1862 = vunpack.c.l.b16 %v1798
    %v1863 = vunpack.c.h.b16 %v1798
    %v1864 = vunpack.c.l.b16 %v1799
    %v1865 = vunpack.c.h.b16 %v1799
    %v1866 = vunpack.c.l.b16 %v1800
    %v1867 = vunpack.c.h.b16 %v1800
    %v1868 = vunpack.c.l.b16 %v1801
    %v1869 = vunpack.c.h.b16 %v1801
    %v1870 = vunpack.c.l.b16 %v1802
    %v1871 = vunpack.c.h.b16 %v1802
    %v1872 = vunpack.c.l.b16 %v1803
    %v1873 = vunpack.c.h.b16 %v1803
    %v1874 = vunpack.c.l.b16 %v1804
    %v1875 = vunpack.c.h.b16 %v1804
    %v1876 = vunpack.c.l.b16 %v1805
    %v1877 = vunpack.c.h.b16 %v1805
    %v1878 = vunpack.c.l.b16 %v1806
    %v1879 = vunpack.c.h.b16 %v1806
    %v1880 = vunpack.c.l.b16 %v1807
    %v1881 = vunpack.c.h.b16 %v1807
    %v1882 = vunpack.c.l.b16 %v1808
    %v1883 = vunpack.c.h.b16 %v1808
    %v1884 = vunpack.c.l.b16 %v1809
    %v1885 = vunpack.c.h.b16 %v1809
    %v1886 = vunpack.c.l.b16 %v1810
    %v1887 = vunpack.c.h.b16 %v1810
    %v1888 = vunpack.c.l.b16 %v1811
    %v1889 = vunpack.c.h.b16 %v1811
    %v1890 = vunpack.c.l.b16 %v1812
    %v1891 = vunpack.c.h.b16 %v1812
    %v1892 = vunpack.c.l.b16 %v1813
    %v1893 = vunpack.c.h.b16 %v1813
    %v1894 = vunpack.c.l.b16 %v1814
    %v1895 = vunpack.c.h.b16 %v1814
    %v1896 = vunpack.c.l.b16 %v1815
    %v1897 = vunpack.c.h.b16 %v1815
    %v1898 = vunpack.c.l.b16 %v1816
    %v1899 = vunpack.c.h.b16 %v1816
    %v1900 = vunpack.c.l.b16 %v1817
    %v1901 = vunpack.c.h.b16 %v1817
    %v1902 = vunpack.c.l.b16 %v1818
    %v1903 = vunpack.c.h.b16 %v1818
    %v1904 = vunpack.c.l.b16 %v1819
    %v1905 = vunpack.c.h.b16 %v1819
    %v1906 = vunpack.c.l.b16 %v1820
    %v1907 = vunpack.c.h.b16 %v1820
    %v1908 = vunpack.c.l.b16 %v1821
    %v1909 = vunpack.c.h.b16 %v1821
    %v1910 = vunpack.c.l.b16 %v1822
    %v1911 = vunpack.c.h.b16 %v1822
    %v1912 = vunpack.c.l.b16 %v1823
    %v1913 = vunpack.c.h.b16 %v1823
    %v1914 = vunpack.c.l.b16 %v1824
    %v1915 = vunpack.c.h.b16 %v1824
    %v1916 = vunpack.c.l.b16 %v1825
    %v1917 = vunpack.c.h.b16 %v1825
    %v1918 = vunpack.c.l.b16 %v1826
    %v1919 = vunpack.c.h.b16 %v1826
    %v1920 = vunpack.c.l.b16 %v1827
    %v1921 = vunpack.c.h.b16 %v1827
    %v1922 = vunpack.c.l.b16 %v1828
    %v1923 = vunpack.c.h.b16 %v1828
    %v1924 = vunpack.c.l.b16 %v1829
    %v1925 = vunpack.c.h.b16 %v1829
    %v1926 = vpack.c.b16 %v1864, %v1862
    %v1927 = vpack.c.b16 %v1865, %v1863
    %v1928 = vpack.c.b16 %v1868, %v1866
    %v1929 = vpack.c.b16 %v1869, %v1867
    %v1930 = vpack.c.b16 %v1872, %v1870
    %v1931 = vpack.c.b16 %v1873, %v1871
    %v1932 = vpack.c.b16 %v1876, %v1874
    %v1933 = vpack.c.b16 %v1877, %v1875
    %v1934 = vpack.c.b16 %v1880, %v1878
    %v1935 = vpack.c.b16 %v1881, %v1879
    %v1936 = vpack.c.b16 %v1884, %v1882
    %v1937 = vpack.c.b16 %v1885, %v1883
    %v1938 = vpack.c.b16 %v1888, %v1886
    %v1939 = vpack.c.b16 %v1889, %v1887
    %v1940 = vpack.c.b16 %v1892, %v1890
    %v1941 = vpack.c.b16 %v1893, %v1891
    %v1942 = vpack.c.b16 %v1896, %v1894
    %v1943 = vpack.c.b16 %v1897, %v1895
    %v1944 = vpack.c.b16 %v1900, %v1898
    %v1945 = vpack.c.b16 %v1901, %v1899
    %v1946 = vpack.c.b16 %v1904, %v1902
    %v1947 = vpack.c.b16 %v1905, %v1903
    %v1948 = vpack.c.b16 %v1908, %v1906
    %v1949 = vpack.c.b16 %v1909, %v1907
    %v1950 = vpack.c.b16 %v1912, %v1910
    %v1951 = vpack.c.b16 %v1913, %v1911
    %v1952 = vpack.c.b16 %v1916, %v1914
    %v1953 = vpack.c.b16 %v1917, %v1915
    %v1954 = vpack.c.b16 %v1920, %v1918
    %v1955 = vpack.c.b16 %v1921, %v1919
    %v1956 = vpack.c.b16 %v1924, %v1922
    %v1957 = vpack.c.b16 %v1925, %v1923
    %1990 = vmatprep.subr.bf16.mxu0 %v1941
    %1991 = vmatpush1.bf16.msra.mxu0 %v1940
    %1992 = vmatprep.subr.bf16.mxu0 %v1939
    %1993 = vmatpush1.bf16.msra.mxu0 %v1938
    %1994 = vmatprep.subr.bf16.mxu0 %v1937
    %1995 = vmatpush1.bf16.msra.mxu0 %v1936
    %1996 = vmatprep.subr.bf16.mxu0 %v1935
    %1997 = vmatpush1.bf16.msra.mxu0 %v1934
    %1998 = vmatprep.subr.bf16.mxu0 %v1933
    %1999 = vmatpush1.bf16.msra.mxu0 %v1932
    %2000 = vmatprep.subr.bf16.mxu0 %v1931
    %2001 = vmatpush1.bf16.msra.mxu0 %v1930
    %2002 = vmatprep.subr.bf16.mxu0 %v1929
    %2003 = vmatpush1.bf16.msra.mxu0 %v1928
    %2004 = vmatprep.subr.bf16.mxu0 %v1927
    %2005 = vmatpush1.bf16.msra.mxu0 %v1926
    %2006 = vmatprep.subr.bf16.mxu0 %v1957
    %2007 = vmatpush2.bf16.msra.mxu0 %v1956
    %2008 = vmatprep.subr.bf16.mxu0 %v1955
    %2009 = vmatpush2.bf16.msra.mxu0 %v1954
    %2010 = vmatprep.subr.bf16.mxu0 %v1953
    %2011 = vmatpush2.bf16.msra.mxu0 %v1952
    %2012 = vmatprep.subr.bf16.mxu0 %v1951
    %2013 = vmatpush2.bf16.msra.mxu0 %v1950
    %2014 = vmatprep.subr.bf16.mxu0 %v1949
    %2015 = vmatpush2.bf16.msra.mxu0 %v1948
    %2016 = vmatprep.subr.bf16.mxu0 %v1947
    %2017 = vmatpush2.bf16.msra.mxu0 %v1946
    %2018 = vmatprep.subr.bf16.mxu0 %v1945
    %2019 = vmatpush2.bf16.msra.mxu0 %v1944
    %2020 = vmatprep.subr.bf16.mxu0 %v1943
    %2021 = vmatpush2.bf16.msra.mxu0 %v1942
    %2022 = vmatprep.mubr.bf16.mxu0 %v1797
    %2023 = vmatmul.mubr.bf16.gmra.mxu0 %v1796
    %v2024 = vpop.f32.mrf.mxu0
    %v2025 = vadd.f32 0.0, %v2024
    %v2026 = vpop.f32.mrf.mxu0
    %v2027 = vadd.f32 0.0, %v2026
    %v2028 = vpop.f32.mrf.mxu0
    %v2029 = vadd.f32 0.0, %v2028
    %v2030 = vpop.f32.mrf.mxu0
    %v2031 = vadd.f32 0.0, %v2030
    %2032 = vdwg.mxu0
    %v2033 = vld [vmem:[%s18] sm:$0xf]
    %v2034 = vld [vmem:[%s18 + $0x4] sm:$0xf]
    %v2035 = vld [vmem:[%s18 + $0x8] sm:$0xf]
    %v2036 = vld [vmem:[%s18 + $0xc] sm:$0xf]
    %v2037 = vld [vmem:[%s18 + $0x10] sm:$0xf]
    %v2038 = vld [vmem:[%s18 + $0x14] sm:$0xf]
    %v2039 = vld [vmem:[%s18 + $0x18] sm:$0xf]
    %v2040 = vld [vmem:[%s18 + $0x1c] sm:$0xf]
    %v2041 = vld [vmem:[%s18 + $0x20] sm:$0xf]
    %v2042 = vld [vmem:[%s18 + $0x24] sm:$0xf]
    %v2043 = vld [vmem:[%s18 + $0x28] sm:$0xf]
    %v2044 = vld [vmem:[%s18 + $0x2c] sm:$0xf]
    %v2045 = vld [vmem:[%s18 + $0x30] sm:$0xf]
    %v2046 = vld [vmem:[%s18 + $0x34] sm:$0xf]
    %v2047 = vld [vmem:[%s18 + $0x38] sm:$0xf]
    %v2048 = vld [vmem:[%s18 + $0x3c] sm:$0xf]
    %v2049 = vld [vmem:[%s18 + $0x40] sm:$0xf]
    %v2050 = vld [vmem:[%s18 + $0x44] sm:$0xf]
    %v2051 = vld [vmem:[%s18 + $0x48] sm:$0xf]
    %v2052 = vld [vmem:[%s18 + $0x4c] sm:$0xf]
    %v2053 = vld [vmem:[%s18 + $0x50] sm:$0xf]
    %v2054 = vld [vmem:[%s18 + $0x54] sm:$0xf]
    %v2055 = vld [vmem:[%s18 + $0x58] sm:$0xf]
    %v2056 = vld [vmem:[%s18 + $0x5c] sm:$0xf]
    %v2057 = vld [vmem:[%s18 + $0x60] sm:$0xf]
    %v2058 = vld [vmem:[%s18 + $0x64] sm:$0xf]
    %v2059 = vld [vmem:[%s18 + $0x68] sm:$0xf]
    %v2060 = vld [vmem:[%s18 + $0x6c] sm:$0xf]
    %v2061 = vld [vmem:[%s18 + $0x70] sm:$0xf]
    %v2062 = vld [vmem:[%s18 + $0x74] sm:$0xf]
    %v2063 = vld [vmem:[%s18 + $0x78] sm:$0xf]
    %v2064 = vld [vmem:[%s18 + $0x7c] sm:$0xf]
    %v2065 = vld [vmem:[%s19] sm:$0xff]
    %v2066 = vld [vmem:[#allocation15] sm:$0x1]
    %v2067 = vld [vmem:[#allocation16] sm:$0x1]
    %v2068 = vadd.f32 %v2025, %v2029
    %v2069 = vrot.slane %v2068, 4
    %v2070 = vadd.f32 %v2068, %v2069
    %v2071 = vrot.slane %v2070, 2
    %v2072 = vadd.f32 %v2070, %v2071
    %v2073 = vrot.slane %v2072, 1
    %v2074 = vadd.f32 %v2072, %v2073
    %v2075 = vadd.f32 %v2027, %v2031
    %v2076 = vrot.slane %v2075, 4
    %v2077 = vadd.f32 %v2075, %v2076
    %v2078 = vrot.slane %v2077, 2
    %v2079 = vadd.f32 %v2077, %v2078
    %v2080 = vrot.slane %v2079, 1
    %v2081 = vadd.f32 %v2079, %v2080
    %v2082 = vmul.f32 %v2025, %v2025
    %v2083 = vmul.f32 %v2027, %v2027
    %v2084 = vmul.f32 %v2029, %v2029
    %v2085 = vmul.f32 %v2031, %v2031
    %v2086 = vadd.f32 %v2082, %v2084
    %v2087 = vrot.slane %v2086, 4
    %v2088 = vadd.f32 %v2086, %v2087
    %v2089 = vrot.slane %v2088, 2
    %v2090 = vadd.f32 %v2088, %v2089
    %v2091 = vrot.slane %v2090, 1
    %v2092 = vadd.f32 %v2090, %v2091
    %v2093 = vadd.f32 %v2083, %v2085
    %v2094 = vrot.slane %v2093, 4
    %v2095 = vadd.f32 %v2093, %v2094
    %v2096 = vrot.slane %v2095, 2
    %v2097 = vadd.f32 %v2095, %v2096
    %v2098 = vrot.slane %v2097, 1
    %v2099 = vadd.f32 %v2097, %v2098
    %v2100 = vmul.f32 %v227, %v2074
    %v2101 = vmul.f32 %v227, %v2081
    %v2102 = vmul.f32 %v228, %v2092
    %v2103 = vmul.f32 %v228, %v2099
    %v2104 = vadd.f32 %v2100, %v2102
    %v2105 = vadd.f32 %v2101, %v2103
    %v2106 = vunpack.c.l.bf16 %v2033
    %v2107 = vunpack.c.l.bf16 %v2034
    %v2108 = vunpack.c.l.bf16 %v2035
    %v2109 = vunpack.c.l.bf16 %v2036
    %v2110 = vunpack.c.l.bf16 %v2037
    %v2111 = vunpack.c.l.bf16 %v2038
    %v2112 = vunpack.c.l.bf16 %v2039
    %v2113 = vunpack.c.l.bf16 %v2040
    %v2114 = vunpack.c.l.bf16 %v2041
    %v2115 = vunpack.c.l.bf16 %v2042
    %v2116 = vunpack.c.l.bf16 %v2043
    %v2117 = vunpack.c.l.bf16 %v2044
    %v2118 = vunpack.c.l.bf16 %v2045
    %v2119 = vunpack.c.l.bf16 %v2046
    %v2120 = vunpack.c.l.bf16 %v2047
    %v2121 = vunpack.c.l.bf16 %v2048
    %v2122 = vunpack.c.l.bf16 %v2049
    %v2123 = vunpack.c.l.bf16 %v2050
    %v2124 = vunpack.c.l.bf16 %v2051
    %v2125 = vunpack.c.l.bf16 %v2052
    %v2126 = vunpack.c.l.bf16 %v2053
    %v2127 = vunpack.c.l.bf16 %v2054
    %v2128 = vunpack.c.l.bf16 %v2055
    %v2129 = vunpack.c.l.bf16 %v2056
    %v2130 = vunpack.c.l.bf16 %v2057
    %v2131 = vunpack.c.l.bf16 %v2058
    %v2132 = vunpack.c.l.bf16 %v2059
    %v2133 = vunpack.c.l.bf16 %v2060
    %v2134 = vunpack.c.l.bf16 %v2061
    %v2135 = vunpack.c.l.bf16 %v2062
    %v2136 = vunpack.c.l.bf16 %v2063
    %v2137 = vunpack.c.l.bf16 %v2064
    %2138 = vmatprep.subr.mxu0 0.0
    %2139 = vmatpush1.msra.mxu0 %v2121
    %2140 = vmatprep.subr.mxu0 0.0
    %2141 = vmatpush1.msra.mxu0 %v2120
    %2142 = vmatprep.subr.mxu0 0.0
    %2143 = vmatpush1.msra.mxu0 %v2119
    %2144 = vmatprep.subr.mxu0 0.0
    %2145 = vmatpush1.msra.mxu0 %v2118
    %2146 = vmatprep.subr.mxu0 0.0
    %2147 = vmatpush1.msra.mxu0 %v2117
    %2148 = vmatprep.subr.mxu0 0.0
    %2149 = vmatpush1.msra.mxu0 %v2116
    %2150 = vmatprep.subr.mxu0 0.0
    %2151 = vmatpush1.msra.mxu0 %v2115
    %2152 = vmatprep.subr.mxu0 0.0
    %2153 = vmatpush1.msra.mxu0 %v2114
    %2154 = vmatprep.subr.mxu0 0.0
    %2155 = vmatpush1.msra.mxu0 %v2113
    %2156 = vmatprep.subr.mxu0 0.0
    %2157 = vmatpush1.msra.mxu0 %v2112
    %2158 = vmatprep.subr.mxu0 0.0
    %2159 = vmatpush1.msra.mxu0 %v2111
    %2160 = vmatprep.subr.mxu0 0.0
    %2161 = vmatpush1.msra.mxu0 %v2110
    %2162 = vmatprep.subr.mxu0 0.0
    %2163 = vmatpush1.msra.mxu0 %v2109
    %2164 = vmatprep.subr.mxu0 0.0
    %2165 = vmatpush1.msra.mxu0 %v2108
    %2166 = vmatprep.subr.mxu0 0.0
    %2167 = vmatpush1.msra.mxu0 %v2107
    %2168 = vmatprep.subr.mxu0 0.0
    %2169 = vmatpush1.msra.mxu0 %v2106
    %2170 = vmatprep.subr.mxu0 0.0
    %2171 = vmatpush2.msra.mxu0 %v2137
    %2172 = vmatprep.subr.mxu0 0.0
    %2173 = vmatpush2.msra.mxu0 %v2136
    %2174 = vmatprep.subr.mxu0 0.0
    %2175 = vmatpush2.msra.mxu0 %v2135
    %2176 = vmatprep.subr.mxu0 0.0
    %2177 = vmatpush2.msra.mxu0 %v2134
    %2178 = vmatprep.subr.mxu0 0.0
    %2179 = vmatpush2.msra.mxu0 %v2133
    %2180 = vmatprep.subr.mxu0 0.0
    %2181 = vmatpush2.msra.mxu0 %v2132
    %2182 = vmatprep.subr.mxu0 0.0
    %2183 = vmatpush2.msra.mxu0 %v2131
    %2184 = vmatprep.subr.mxu0 0.0
    %2185 = vmatpush2.msra.mxu0 %v2130
    %2186 = vmatprep.subr.mxu0 0.0
    %2187 = vmatpush2.msra.mxu0 %v2129
    %2188 = vmatprep.subr.mxu0 0.0
    %2189 = vmatpush2.msra.mxu0 %v2128
    %2190 = vmatprep.subr.mxu0 0.0
    %2191 = vmatpush2.msra.mxu0 %v2127
    %2192 = vmatprep.subr.mxu0 0.0
    %2193 = vmatpush2.msra.mxu0 %v2126
    %2194 = vmatprep.subr.mxu0 0.0
    %2195 = vmatpush2.msra.mxu0 %v2125
    %2196 = vmatprep.subr.mxu0 0.0
    %2197 = vmatpush2.msra.mxu0 %v2124
    %2198 = vmatprep.subr.mxu0 0.0
    %2199 = vmatpush2.msra.mxu0 %v2123
    %2200 = vmatprep.subr.mxu0 0.0
    %2201 = vmatpush2.msra.mxu0 %v2122
    %2202 = vmatprep.mubr.f32.mxu0 %v2105
    %2203 = vmatmul.mubr.f32.gmra.mxu0 %v2104
    %v2204 = vpop.f32.mrf.mxu0
    %v2205 = vadd.f32 0.0, %v2204
    %v2206 = vpop.f32.mrf.mxu0
    %2207 = vdwg.mxu0
    %v2208 = vrcp.pop 64.0
    %v2209 = vmul.f32 %v2205, %v2208
    %v2210 = vmul.f32 %v2209, %v2209
    %v2212 = vrot.slane %v2210, 7
    %v2214 = vsub.f32 %v2209, %v2212
    %v2215 = vmax.f32 %v2214, 0.0
    %v2216 = vadd.f32 %v2215, 1e-05
    %v2217 = vrsqrt.pop %v2216
    %v2220 = vunpack.c.l.s4 1966171168
    %v2221 = vunpack.c.0.s8 %v2220
    %v2222 = vlaneseq
    %v2223 = vshrl.u32 %v2222, 7
    %v2224 = vsub.s32 %v2221, %v2223
    %v2225 = vrot.slane %v2217, %v2224
    %v2226 = vcombine.high %v2225, %v2225
    %v2228 = vunpack.c.l.s4 1966171168
    %v2229 = vunpack.c.0.s8 %v2228
    %v2230 = vlaneseq
    %v2231 = vshrl.u32 %v2230, 7
    %v2232 = vsub.s32 %v2229, %v2231
    %v2233 = vrot.slane %v2226, %v2232
    %v2235 = vmul.f32 %v2066, %v2233
    %v2236 = vmul.f32 %v2209, %v2235
    %v2237 = vsub.f32 %v2067, %v2236
    %v2239 = vlaneseq
    %v2240 = vshrl.u32 %v2239, 7
    %v2241 = vsub.s32 0, %v2240
    %v2242 = vrot.slane %v2235, %v2241
    %v2244 = vmul.f32 %v227, %v2242
    %v2246 = vlaneseq
    %v2247 = vshrl.u32 %v2246, 7
    %v2248 = vsub.s32 0, %v2247
    %v2249 = vrot.slane %v2237, %v2248
    %v2251 = vmul.f32 %v228, %v2249
    %v2252 = vadd.f32 %v2244, %v2251
    %v2253 = vunpack.c.l.bf16 %v2065
    %v2254 = vunpack.c.h.bf16 %v2065
    %v2256 = vsel %vm238, %v2252, 0
    %2258 = vmatprep.subr.mxu0 0.0
    %2259 = vmatpush1.msra.mxu0 0.0
    %2260 = vmatprep.subr.mxu0 0.0
    %2261 = vmatpush1.msra.mxu0 0.0
    %2262 = vmatprep.subr.mxu0 0.0
    %2263 = vmatpush1.msra.mxu0 0.0
    %2264 = vmatprep.subr.mxu0 0.0
    %2265 = vmatpush1.msra.mxu0 0.0
    %2266 = vmatprep.subr.mxu0 0.0
    %2267 = vmatpush1.msra.mxu0 0.0
    %2268 = vmatprep.subr.mxu0 0.0
    %2269 = vmatpush1.msra.mxu0 0.0
    %2270 = vmatprep.subr.mxu0 0.0
    %2271 = vmatpush1.msra.mxu0 0.0
    %2272 = vmatprep.subr.mxu0 0.0
    %2273 = vmatpush1.msra.mxu0 0.0
    %2274 = vmatprep.subr.mxu0 0.0
    %2275 = vmatpush1.msra.mxu0 0.0
    %2276 = vmatprep.subr.mxu0 0.0
    %2277 = vmatpush1.msra.mxu0 0.0
    %2278 = vmatprep.subr.mxu0 0.0
    %2279 = vmatpush1.msra.mxu0 0.0
    %2280 = vmatprep.subr.mxu0 0.0
    %2281 = vmatpush1.msra.mxu0 0.0
    %2282 = vmatprep.subr.mxu0 0.0
    %2283 = vmatpush1.msra.mxu0 0.0
    %2284 = vmatprep.subr.mxu0 0.0
    %2285 = vmatpush1.msra.mxu0 0.0
    %2286 = vmatprep.subr.mxu0 0.0
    %2287 = vmatpush1.msra.mxu0 0.0
    %2288 = vmatprep.subr.mxu0 %v2254
    %2289 = vmatpush1.msra.mxu0 %v2253
    %2290 = vmatprep.subr.mxu0 0.0
    %2291 = vmatpush2.msra.mxu0 0.0
    %2292 = vmatprep.subr.mxu0 0.0
    %2293 = vmatpush2.msra.mxu0 0.0
    %2294 = vmatprep.subr.mxu0 0.0
    %2295 = vmatpush2.msra.mxu0 0.0
    %2296 = vmatprep.subr.mxu0 0.0
    %2297 = vmatpush2.msra.mxu0 0.0
    %2298 = vmatprep.subr.mxu0 0.0
    %2299 = vmatpush2.msra.mxu0 0.0
    %2300 = vmatprep.subr.mxu0 0.0
    %2301 = vmatpush2.msra.mxu0 0.0
    %2302 = vmatprep.subr.mxu0 0.0
    %2303 = vmatpush2.msra.mxu0 0.0
    %2304 = vmatprep.subr.mxu0 0.0
    %2305 = vmatpush2.msra.mxu0 0.0
    %2306 = vmatprep.subr.mxu0 0.0
    %2307 = vmatpush2.msra.mxu0 0.0
    %2308 = vmatprep.subr.mxu0 0.0
    %2309 = vmatpush2.msra.mxu0 0.0
    %2310 = vmatprep.subr.mxu0 0.0
    %2311 = vmatpush2.msra.mxu0 0.0
    %2312 = vmatprep.subr.mxu0 0.0
    %2313 = vmatpush2.msra.mxu0 0.0
    %2314 = vmatprep.subr.mxu0 0.0
    %2315 = vmatpush2.msra.mxu0 0.0
    %2316 = vmatprep.subr.mxu0 0.0
    %2317 = vmatpush2.msra.mxu0 0.0
    %2318 = vmatprep.subr.mxu0 0.0
    %2319 = vmatpush2.msra.mxu0 0.0
    %2320 = vmatprep.subr.mxu0 0.0
    %2321 = vmatpush2.msra.mxu0 0.0
    %2322 = vmatprep.mubr.f32.mxu0 0.0
    %2323 = vmatmul.mubr.f32.gmra.mxu0 %v2256
    %v2324 = vpop.f32.mrf.mxu0
    %v2325 = vadd.f32 0.0, %v2324
    %v2326 = vpop.f32.mrf.mxu0
    %v2327 = vadd.f32 0.0, %v2326
    %2328 = vdwg.mxu0
    %v2329 = vlaneseq
    %v2330 = vshrl.u32 %v2329, 7
    %v2331 = vsub.s32 0, %v2330
    %v2332 = vrot.slane %v2325, %v2331
    %v2333 = vlaneseq
    %v2334 = vshrl.u32 %v2333, 7
    %v2335 = vsub.s32 0, %v2334
    %v2336 = vrot.slane %v2327, %v2335
    %v2337 = vmul.f32 %v2025, %v2332
    %v2338 = vmul.f32 %v2027, %v2336
    %v2339 = vmul.f32 %v2029, %v2332
    %v2340 = vmul.f32 %v2031, %v2336
    %v2341 = vlaneseq
    %v2342 = vshrl.u32 %v2341, 7
    %v2343 = vsub.s32 1, %v2342
    %v2344 = vrot.slane %v2325, %v2343
    %v2345 = vlaneseq
    %v2346 = vshrl.u32 %v2345, 7
    %v2347 = vsub.s32 1, %v2346
    %v2348 = vrot.slane %v2327, %v2347
    %v2349 = vadd.f32 %v2337, %v2344
    %v2350 = vadd.f32 %v2338, %v2348
    %v2351 = vadd.f32 %v2339, %v2344
    %v2352 = vadd.f32 %v2340, %v2348
    %v2353 = vmax.f32 %v2349, 0.0
    %v2354 = vmax.f32 %v2350, 0.0
    %v2355 = vmax.f32 %v2351, 0.0
    %v2356 = vmax.f32 %v2352, 0.0
    %v2357 = vmul.f32 %v2353, %v641
    %v2358 = vmul.f32 %v2354, %v641
    %v2359 = vmul.f32 %v2355, %v646
    %v2360 = vmul.f32 %v2356, %v646
    %v2361 = vpack.c.bf16 %v2359, %v2357
    %v2362 = vpack.c.bf16 %v2360, %v2358
    %v2363 = vld [vmem:[#allocation18] sm:$0xff]
    %v2364 = vld [vmem:[#allocation18 + $0x8] sm:$0xff]
    %v2365 = vld [vmem:[#allocation18 + $0x10] sm:$0xff]
    %v2366 = vld [vmem:[#allocation18 + $0x18] sm:$0xff]
    %v2367 = vld [vmem:[#allocation18 + $0x20] sm:$0xff]
    %v2368 = vld [vmem:[#allocation18 + $0x28] sm:$0xff]
    %v2369 = vld [vmem:[#allocation18 + $0x30] sm:$0xff]
    %v2370 = vld [vmem:[#allocation18 + $0x38] sm:$0xff]
    %v2371 = vld [vmem:[#allocation18 + $0x40] sm:$0xff]
    %v2372 = vld [vmem:[#allocation18 + $0x48] sm:$0xff]
    %v2373 = vld [vmem:[#allocation18 + $0x50] sm:$0xff]
    %v2374 = vld [vmem:[#allocation18 + $0x58] sm:$0xff]
    %v2375 = vld [vmem:[#allocation18 + $0x60] sm:$0xff]
    %v2376 = vld [vmem:[#allocation18 + $0x68] sm:$0xff]
    %v2377 = vld [vmem:[#allocation18 + $0x70] sm:$0xff]
    %v2378 = vld [vmem:[#allocation18 + $0x78] sm:$0xff]
    %v2379 = vld [vmem:[#allocation18 + $0x80] sm:$0xff]
    %v2380 = vld [vmem:[#allocation18 + $0x88] sm:$0xff]
    %v2381 = vld [vmem:[#allocation18 + $0x90] sm:$0xff]
    %v2382 = vld [vmem:[#allocation18 + $0x98] sm:$0xff]
    %v2383 = vld [vmem:[#allocation18 + $0xa0] sm:$0xff]
    %v2384 = vld [vmem:[#allocation18 + $0xa8] sm:$0xff]
    %v2385 = vld [vmem:[#allocation18 + $0xb0] sm:$0xff]
    %v2386 = vld [vmem:[#allocation18 + $0xb8] sm:$0xff]
    %v2387 = vld [vmem:[#allocation18 + $0xc0] sm:$0xff]
    %v2388 = vld [vmem:[#allocation18 + $0xc8] sm:$0xff]
    %v2389 = vld [vmem:[#allocation18 + $0xd0] sm:$0xff]
    %v2390 = vld [vmem:[#allocation18 + $0xd8] sm:$0xff]
    %v2391 = vld [vmem:[#allocation18 + $0xe0] sm:$0xff]
    %v2392 = vld [vmem:[#allocation18 + $0xe8] sm:$0xff]
    %v2393 = vld [vmem:[#allocation18 + $0xf0] sm:$0xff]
    %v2394 = vld [vmem:[#allocation18 + $0xf8] sm:$0xff]
    %v2395 = vld [vmem:[#allocation19] sm:$0x3]
    %v2397 = vlaneseq
    %v2398 = vshrl.u32 %v2397, 7
    %v2399 = vsub.s32 0, %v2398
    %v2400 = vrot.slane %v2395, %v2399
    %v2401 = vlaneseq
    %v2402 = vshrl.u32 %v2401, 7
    %v2403 = vsub.s32 1, %v2402
    %v2404 = vrot.slane %v2395, %v2403
    %v2439 = vunpack.c.l.b16 %v2363
    %v2440 = vunpack.c.h.b16 %v2363
    %v2441 = vunpack.c.l.b16 %v2364
    %v2442 = vunpack.c.h.b16 %v2364
    %v2443 = vunpack.c.l.b16 %v2365
    %v2444 = vunpack.c.h.b16 %v2365
    %v2445 = vunpack.c.l.b16 %v2366
    %v2446 = vunpack.c.h.b16 %v2366
    %v2447 = vunpack.c.l.b16 %v2367
    %v2448 = vunpack.c.h.b16 %v2367
    %v2449 = vunpack.c.l.b16 %v2368
    %v2450 = vunpack.c.h.b16 %v2368
    %v2451 = vunpack.c.l.b16 %v2369
    %v2452 = vunpack.c.h.b16 %v2369
    %v2453 = vunpack.c.l.b16 %v2370
    %v2454 = vunpack.c.h.b16 %v2370
    %v2455 = vunpack.c.l.b16 %v2371
    %v2456 = vunpack.c.h.b16 %v2371
    %v2457 = vunpack.c.l.b16 %v2372
    %v2458 = vunpack.c.h.b16 %v2372
    %v2459 = vunpack.c.l.b16 %v2373
    %v2460 = vunpack.c.h.b16 %v2373
    %v2461 = vunpack.c.l.b16 %v2374
    %v2462 = vunpack.c.h.b16 %v2374
    %v2463 = vunpack.c.l.b16 %v2375
    %v2464 = vunpack.c.h.b16 %v2375
    %v2465 = vunpack.c.l.b16 %v2376
    %v2466 = vunpack.c.h.b16 %v2376
    %v2467 = vunpack.c.l.b16 %v2377
    %v2468 = vunpack.c.h.b16 %v2377
    %v2469 = vunpack.c.l.b16 %v2378
    %v2470 = vunpack.c.h.b16 %v2378
    %v2471 = vunpack.c.l.b16 %v2379
    %v2472 = vunpack.c.h.b16 %v2379
    %v2473 = vunpack.c.l.b16 %v2380
    %v2474 = vunpack.c.h.b16 %v2380
    %v2475 = vunpack.c.l.b16 %v2381
    %v2476 = vunpack.c.h.b16 %v2381
    %v2477 = vunpack.c.l.b16 %v2382
    %v2478 = vunpack.c.h.b16 %v2382
    %v2479 = vunpack.c.l.b16 %v2383
    %v2480 = vunpack.c.h.b16 %v2383
    %v2481 = vunpack.c.l.b16 %v2384
    %v2482 = vunpack.c.h.b16 %v2384
    %v2483 = vunpack.c.l.b16 %v2385
    %v2484 = vunpack.c.h.b16 %v2385
    %v2485 = vunpack.c.l.b16 %v2386
    %v2486 = vunpack.c.h.b16 %v2386
    %v2487 = vunpack.c.l.b16 %v2387
    %v2488 = vunpack.c.h.b16 %v2387
    %v2489 = vunpack.c.l.b16 %v2388
    %v2490 = vunpack.c.h.b16 %v2388
    %v2491 = vunpack.c.l.b16 %v2389
    %v2492 = vunpack.c.h.b16 %v2389
    %v2493 = vunpack.c.l.b16 %v2390
    %v2494 = vunpack.c.h.b16 %v2390
    %v2495 = vunpack.c.l.b16 %v2391
    %v2496 = vunpack.c.h.b16 %v2391
    %v2497 = vunpack.c.l.b16 %v2392
    %v2498 = vunpack.c.h.b16 %v2392
    %v2499 = vunpack.c.l.b16 %v2393
    %v2500 = vunpack.c.h.b16 %v2393
    %v2501 = vunpack.c.l.b16 %v2394
    %v2502 = vunpack.c.h.b16 %v2394
    %v2503 = vpack.c.b16 %v2441, %v2439
    %v2504 = vpack.c.b16 %v2442, %v2440
    %v2505 = vpack.c.b16 %v2445, %v2443
    %v2506 = vpack.c.b16 %v2446, %v2444
    %v2507 = vpack.c.b16 %v2449, %v2447
    %v2508 = vpack.c.b16 %v2450, %v2448
    %v2509 = vpack.c.b16 %v2453, %v2451
    %v2510 = vpack.c.b16 %v2454, %v2452
    %v2511 = vpack.c.b16 %v2457, %v2455
    %v2512 = vpack.c.b16 %v2458, %v2456
    %v2513 = vpack.c.b16 %v2461, %v2459
    %v2514 = vpack.c.b16 %v2462, %v2460
    %v2515 = vpack.c.b16 %v2465, %v2463
    %v2516 = vpack.c.b16 %v2466, %v2464
    %v2517 = vpack.c.b16 %v2469, %v2467
    %v2518 = vpack.c.b16 %v2470, %v2468
    %v2519 = vpack.c.b16 %v2473, %v2471
    %v2520 = vpack.c.b16 %v2474, %v2472
    %v2521 = vpack.c.b16 %v2477, %v2475
    %v2522 = vpack.c.b16 %v2478, %v2476
    %v2523 = vpack.c.b16 %v2481, %v2479
    %v2524 = vpack.c.b16 %v2482, %v2480
    %v2525 = vpack.c.b16 %v2485, %v2483
    %v2526 = vpack.c.b16 %v2486, %v2484
    %v2527 = vpack.c.b16 %v2489, %v2487
    %v2528 = vpack.c.b16 %v2490, %v2488
    %v2529 = vpack.c.b16 %v2493, %v2491
    %v2530 = vpack.c.b16 %v2494, %v2492
    %v2531 = vpack.c.b16 %v2497, %v2495
    %v2532 = vpack.c.b16 %v2498, %v2496
    %v2533 = vpack.c.b16 %v2501, %v2499
    %v2534 = vpack.c.b16 %v2502, %v2500
    %2567 = vmatprep.subr.bf16.mxu0 %v2518
    %2568 = vmatpush1.bf16.msra.mxu0 %v2517
    %2569 = vmatprep.subr.bf16.mxu0 %v2516
    %2570 = vmatpush1.bf16.msra.mxu0 %v2515
    %2571 = vmatprep.subr.bf16.mxu0 %v2514
    %2572 = vmatpush1.bf16.msra.mxu0 %v2513
    %2573 = vmatprep.subr.bf16.mxu0 %v2512
    %2574 = vmatpush1.bf16.msra.mxu0 %v2511
    %2575 = vmatprep.subr.bf16.mxu0 %v2510
    %2576 = vmatpush1.bf16.msra.mxu0 %v2509
    %2577 = vmatprep.subr.bf16.mxu0 %v2508
    %2578 = vmatpush1.bf16.msra.mxu0 %v2507
    %2579 = vmatprep.subr.bf16.mxu0 %v2506
    %2580 = vmatpush1.bf16.msra.mxu0 %v2505
    %2581 = vmatprep.subr.bf16.mxu0 %v2504
    %2582 = vmatpush1.bf16.msra.mxu0 %v2503
    %2583 = vmatprep.subr.bf16.mxu0 %v2534
    %2584 = vmatpush2.bf16.msra.mxu0 %v2533
    %2585 = vmatprep.subr.bf16.mxu0 %v2532
    %2586 = vmatpush2.bf16.msra.mxu0 %v2531
    %2587 = vmatprep.subr.bf16.mxu0 %v2530
    %2588 = vmatpush2.bf16.msra.mxu0 %v2529
    %2589 = vmatprep.subr.bf16.mxu0 %v2528
    %2590 = vmatpush2.bf16.msra.mxu0 %v2527
    %2591 = vmatprep.subr.bf16.mxu0 %v2526
    %2592 = vmatpush2.bf16.msra.mxu0 %v2525
    %2593 = vmatprep.subr.bf16.mxu0 %v2524
    %2594 = vmatpush2.bf16.msra.mxu0 %v2523
    %2595 = vmatprep.subr.bf16.mxu0 %v2522
    %2596 = vmatpush2.bf16.msra.mxu0 %v2521
    %2597 = vmatprep.subr.bf16.mxu0 %v2520
    %2598 = vmatpush2.bf16.msra.mxu0 %v2519
    %2599 = vmatprep.mubr.bf16.mxu0 %v2362
    %2600 = vmatmul.mubr.bf16.gmra.mxu0 %v2361
    %v2601 = vpop.f32.mrf.mxu0
    %v2602 = vadd.f32 %v2400, %v2601
    %v2603 = vpop.f32.mrf.mxu0
    %v2604 = vadd.f32 %v2404, %v2603
    %v2605 = vpop.f32.mrf.mxu0
    %v2606 = vadd.f32 %v2400, %v2605
    %v2607 = vpop.f32.mrf.mxu0
    %v2608 = vadd.f32 %v2404, %v2607
    %2609 = vdwg.mxu0
    %v2610 = vtanh.pop %v2602
    %v2611 = vtanh.pop %v2604
    %v2612 = vtanh.pop %v2606
    %v2613 = vtanh.pop %v2608
    %2614 = vst [vmem:[%s24] sm:$0xff] %v2610
    %2615 = vst [vmem:[%s24 + $0x8] sm:$0xff] %v2611
    %2616 = vst [vmem:[%s24 + $0x10] sm:$0xff] %v2612
    %2617 = vst [vmem:[%s24 + $0x18] sm:$0xff] %v2613
    // Predicated region
    $region146: #{gen_ac_wgan_gp_1d_forward.1} parent=1 // pred_check
      _
    $region147: #{gen_ac_wgan_gp_1d_forward.1} parent=1 // pred_check_branch
      %2619 = sbr.rel (0) target = $region149
    $region148: #{gen_ac_wgan_gp_1d_forward.1} parent=1 // pred_region
      _
    $region149: #{gen_ac_wgan_gp_1d_forward.1} parent=1 // pred_fallthru
      _
    // Predicated region
    $region150: #{gen_ac_wgan_gp_1d_forward.1} parent=1 // pred_check
      _
    $region151: #{gen_ac_wgan_gp_1d_forward.1} parent=1 // pred_check_branch
      %2621 = sbr.rel (0) target = $region153
    $region152: #{gen_ac_wgan_gp_1d_forward.1} parent=1 // pred_region
      _
    $region153: #{gen_ac_wgan_gp_1d_forward.1} parent=1 // pred_fallthru
      _
    %2622 = vsyncpa [#allocation3], 1
    %2623 = vsyncpa [#allocation5], 1
    %2624 = vsyncpa [#allocation8], 1
    %2625 = vsyncpa [#allocation11], 1
    %2626 = vsyncpa [#allocation14], 1
    %2627 = vsyncpa [#allocation17], 1
    %2628 = vsyncpa [#allocation20], 1

</llo_original>
